<compile_context>
chip_gen: v7x
topology: tpu7x:2x2x1
jax: 0.10.0
libtpu: 0.0.40
codegen_flags: <defaults>
</compile_context>

<pallas_src>
import functools

import jax
import jax.numpy as jnp
from jax.experimental import pallas as pl
from jax.experimental.pallas import tpu as pltpu


def _round_up(v, m):
    return ((v + m - 1) // m) * m


def _layer1_kernel(g_ref, x_ref, w1_ref, b1_ref, w2_ref, b2_ref, bits_ref,
                   p_ref, acc_ref, rs_ref, *, dropout_p):
    """Pass 1: P = dropout(relu(G @ (x@W1 + b1))) @ W2 + b2, tiled over (rows, k)."""
    k = pl.program_id(1)

    @pl.when(k == 0)
    def _():
        acc_ref[...] = jnp.zeros_like(acc_ref)
        rs_ref[...] = jnp.zeros_like(rs_ref)

    g = g_ref[...]                                             # bf16 (tm, tk) tile of G
    # accumulate (G @ x) with bf16 MXU operands, f32 accumulator
    acc_ref[...] += jnp.dot(g, x_ref[...], preferred_element_type=jnp.float32)
    # accumulate rowsum(G) for the exact bias fix-up of the reassociated layer 1
    rs_ref[...] += jnp.sum(g.astype(jnp.float32), axis=1, keepdims=True)

    @pl.when(k == pl.num_programs(1) - 1)
    def _():
        # layer 1: (G @ x) @ W1 + rowsum(G) * b1  ==  G @ (x @ W1 + b1)
        h = jnp.dot(acc_ref[...].astype(jnp.bfloat16), w1_ref[...],
                    preferred_element_type=jnp.float32)
        h = h + rs_ref[...] * b1_ref[...]
        h = jnp.maximum(h, 0.0)                                # ReLU
        if dropout_p > 0.0:
            # inverted dropout with integer threshold (keep prob = 1 - p)
            thr = jnp.uint32(min(int(round(dropout_p * 4294967296.0)), 4294967295))
            keep = bits_ref[...] >= thr
            h = jnp.where(keep, h * (1.0 / (1.0 - dropout_p)), 0.0)
        # fold layer 2's node-local projection so pass 2 is a pure G @ P matmul
        p = jnp.dot(h.astype(jnp.bfloat16), w2_ref[...],
                    preferred_element_type=jnp.float32)
        p_ref[...] = p + b2_ref[...]


def _layer2_kernel(g_ref, p_ref, o_ref, acc_ref):
    """Pass 2: out = G @ P, tiled over (rows, k)."""
    k = pl.program_id(1)

    @pl.when(k == 0)
    def _():
        acc_ref[...] = jnp.zeros_like(acc_ref)

    acc_ref[...] += jnp.dot(g_ref[...], p_ref[...].astype(jnp.bfloat16),
                            preferred_element_type=jnp.float32)

    @pl.when(k == pl.num_programs(1) - 1)
    def _():
        o_ref[...] = acc_ref[...]


def hgcn_forward(x, G, w1, b1, w2, b2, dropout_key, dropout_p, *, tile=128):
    """HGCN forward. x:(N,nfeat), G:(N,N), w1:(nfeat,nhid), b1:(1,nhid),
    w2:(nhid,nout), b2:(1,nout). Returns (N, nout) float32."""
    assert 0.0 <= float(dropout_p) < 1.0, "dropout_p must be in [0, 1)"
    N, nfeat = x.shape
    nhid = w1.shape[1]
    nout = w2.shape[1]

    Np = _round_up(N, tile)
    Fp = _round_up(nfeat, 128)
    Hp = _round_up(nhid, 128)
    Op = _round_up(nout, 128)

    # zero-pad to lane/tile-aligned shapes; bf16 for the MXU operands
    Gp = jnp.pad(G, ((0, Np - N), (0, Np - N))).astype(jnp.bfloat16)
    xp = jnp.pad(x, ((0, Np - N), (0, Fp - nfeat))).astype(jnp.bfloat16)
    w1p = jnp.pad(w1, ((0, Fp - nfeat), (0, Hp - nhid))).astype(jnp.bfloat16)
    w2p = jnp.pad(w2, ((0, Hp - nhid), (0, Op - nout))).astype(jnp.bfloat16)
    b1p = jnp.pad(b1, ((0, 0), (0, Hp - nhid))).astype(jnp.float32)
    b2p = jnp.pad(b2, ((0, 0), (0, Op - nout))).astype(jnp.float32)
    # per-element random bits for dropout (distinct per row tile by construction)
    bits = jax.random.bits(dropout_key, (Np, Hp), dtype=jnp.uint32)

    grid = (Np // tile, Np // tile)
    cparams = pltpu.CompilerParams(
        dimension_semantics=("parallel", "arbitrary"),
        vmem_limit_bytes=64 * 1024 * 1024,
    )

    # ---- pass 1: P = dropout(relu(G @ (x@W1 + b1))) @ W2 + b2 ----
    p_mat = pl.pallas_call(
        functools.partial(_layer1_kernel, dropout_p=float(dropout_p)),
        out_shape=jax.ShapeDtypeStruct((Np, Op), jnp.float32),
        grid=grid,
        in_specs=[
            pl.BlockSpec((tile, tile), lambda i, k: (i, k)),   # G tile
            pl.BlockSpec((tile, Fp), lambda i, k: (k, 0)),     # x tile (reduction rows)
            pl.BlockSpec((Fp, Hp), lambda i, k: (0, 0)),       # W1 (resident)
            pl.BlockSpec((1, Hp), lambda i, k: (0, 0)),        # b1
            pl.BlockSpec((Hp, Op), lambda i, k: (0, 0)),       # W2 (resident)
            pl.BlockSpec((1, Op), lambda i, k: (0, 0)),        # b2
            pl.BlockSpec((tile, Hp), lambda i, k: (i, 0)),     # dropout bits
        ],
        out_specs=pl.BlockSpec((tile, Op), lambda i, k: (i, 0)),
        scratch_shapes=[
            pltpu.VMEM((tile, Fp), jnp.float32),   # f32 accumulator for G @ x
            pltpu.VMEM((tile, 1), jnp.float32),    # f32 accumulator for rowsum(G)
        ],
        compiler_params=cparams,
    )(Gp, xp, w1p, b1p, w2p, b2p, bits)

    # ---- pass 2: out = G @ P ----
    out_p = pl.pallas_call(
        _layer2_kernel,
        out_shape=jax.ShapeDtypeStruct((Np, Op), jnp.float32),
        grid=grid,
        in_specs=[
            pl.BlockSpec((tile, tile), lambda i, k: (i, k)),   # G tile
            pl.BlockSpec((tile, Op), lambda i, k: (k, 0)),     # P tile (reduction rows)
        ],
        out_specs=pl.BlockSpec((tile, Op), lambda i, k: (i, 0)),
        scratch_shapes=[pltpu.VMEM((tile, Op), jnp.float32)],
        compiler_params=cparams,
    )(Gp, p_mat)

    return out_p[:N, :nout]


if __name__ == "__main__":
    # small shapes consistent with HGCN(nfeat, nhid, out, dropout)
    N, nfeat, nhid, nout = 256, 32, 64, 16
    dropout_p = 0.5
    tile = 128

    key = jax.random.PRNGKey(0)
    kx, kg, kw1, kb1, kw2, kb2, kdrop = jax.random.split(key, 7)

    x = jax.random.normal(kx, (N, nfeat), dtype=jnp.float32)
    G = jax.random.uniform(kg, (N, N), dtype=jnp.float32)
    G = G / jnp.sum(G, axis=1, keepdims=True)   # row-normalized propagation matrix

    std1 = 1.0 / jnp.sqrt(jnp.float32(nhid))
    std2 = 1.0 / jnp.sqrt(jnp.float32(nout))
    w1 = jax.random.uniform(kw1, (nfeat, nhid), minval=-std1, maxval=std1,
                            dtype=jnp.float32)
    b1 = jax.random.uniform(kb1, (1, nhid), minval=-std1, maxval=std1,
                            dtype=jnp.float32)
    w2 = jax.random.uniform(kw2, (nhid, nout), minval=-std2, maxval=std2,
                            dtype=jnp.float32)
    b2 = jax.random.uniform(kb2, (1, nout), minval=-std2, maxval=std2,
                            dtype=jnp.float32)

    out = hgcn_forward(x, G, w1, b1, w2, b2, kdrop, dropout_p, tile=tile)
    jax.block_until_ready(out)

    # pure-JAX f32 reference using the identical dropout mask
    Np = _round_up(N, tile)
    Hp = _round_up(nhid, 128)
    bits = jax.random.bits(kdrop, (Np, Hp), dtype=jnp.uint32)[:N, :nhid]
    thr = jnp.uint32(min(int(round(dropout_p * 4294967296.0)), 4294967295))
    h_ref = jnp.maximum(G @ (x @ w1 + b1), 0.0)
    h_ref = jnp.where(bits >= thr, h_ref * (1.0 / (1.0 - dropout_p)), 0.0)
    ref = G @ (h_ref @ w2 + b2)

    assert out.shape == (N, nout)
    assert bool(jnp.all(jnp.isfinite(out)))
    max_err = float(jnp.max(jnp.abs(out - ref)))
    assert max_err < 5e-2, f"max abs error too large: {max_err}"
    print("KERNEL_OK")
</pallas_src>

<mosaic_0001>
module attributes {stable_mosaic.version = 11 : i64} {
  func.func @_layer1_kernel(%arg0: i32, %arg1: i32, %arg2: memref<128x128xbf16, #tpu.memory_space<vmem>>, %arg3: memref<128x128xbf16, #tpu.memory_space<vmem>>, %arg4: memref<128x128xbf16, #tpu.memory_space<vmem>>, %arg5: memref<1x128xf32, #tpu.memory_space<vmem>>, %arg6: memref<128x128xbf16, #tpu.memory_space<vmem>>, %arg7: memref<1x128xf32, #tpu.memory_space<vmem>>, %arg8: memref<128x128xi32, #tpu.memory_space<vmem>>, %arg9: memref<128x128xf32, #tpu.memory_space<vmem>>, %arg10: memref<128x128xf32, #tpu.memory_space<vmem>>, %arg11: memref<128x1xf32, #tpu.memory_space<vmem>>) attributes {dimension_semantics = [#tpu.dimension_semantics<parallel>, #tpu.dimension_semantics<arbitrary>], iteration_bounds = array<i64: 2, 2>, scalar_prefetch = 0 : i64, scratch_operands = 2 : i64, tpu.core_type = #tpu.core_type<tc>, window_params = [{transform_indices = @transform_0, window_bounds = array<i64: 128, 128>}, {transform_indices = @transform_1, window_bounds = array<i64: 128, 128>}, {pipeline_mode = #tpu.pipeline_mode<synchronous>, transform_indices = @transform_2, window_bounds = array<i64: 128, 128>}, {pipeline_mode = #tpu.pipeline_mode<synchronous>, transform_indices = @transform_3, window_bounds = array<i64: 1, 128>}, {pipeline_mode = #tpu.pipeline_mode<synchronous>, transform_indices = @transform_4, window_bounds = array<i64: 128, 128>}, {pipeline_mode = #tpu.pipeline_mode<synchronous>, transform_indices = @transform_5, window_bounds = array<i64: 1, 128>}, {transform_indices = @transform_6, window_bounds = array<i64: 128, 128>}, {transform_indices = @transform_7, window_bounds = array<i64: 128, 128>}]} {
    %c0_i32 = arith.constant 0 : i32
    %0 = arith.cmpi eq, %arg1, %c0_i32 : i32
    %1 = arith.extui %0 : i1 to i32
    %c0_i32_0 = arith.constant 0 : i32
    %2 = arith.cmpi ne, %1, %c0_i32_0 : i32
    scf.if %2 {
      %cst_14 = arith.constant 0.000000e+00 : f32
      %18 = vector.broadcast %cst_14 : f32 to vector<128x128xf32>
      %c0_15 = arith.constant 0 : index
      %c0_16 = arith.constant 0 : index
      %19 = vector.load %arg10[%c0_15, %c0_16] : memref<128x128xf32, #tpu.memory_space<vmem>>, vector<128x128xf32>
      tpu.vector_store %arg10[%c0_15, %c0_16], %18 {strides = array<i32>} : memref<128x128xf32, #tpu.memory_space<vmem>>, vector<128x128xf32>,
      %cst_17 = arith.constant 0.000000e+00 : f32
      %20 = vector.broadcast %cst_17 : f32 to vector<128x1xf32>
      %c0_18 = arith.constant 0 : index
      %c0_19 = arith.constant 0 : index
      %21 = vector.load %arg11[%c0_18, %c0_19] : memref<128x1xf32, #tpu.memory_space<vmem>>, vector<128x1xf32>
      tpu.vector_store %arg11[%c0_18, %c0_19], %20 {strides = array<i32>} : memref<128x1xf32, #tpu.memory_space<vmem>>, vector<128x1xf32>,
    } else {
    }
    %c0 = arith.constant 0 : index
    %c0_1 = arith.constant 0 : index
    %3 = vector.load %arg2[%c0, %c0_1] : memref<128x128xbf16, #tpu.memory_space<vmem>>, vector<128x128xbf16>
    %c0_2 = arith.constant 0 : index
    %c0_3 = arith.constant 0 : index
    %4 = vector.load %arg10[%c0_2, %c0_3] : memref<128x128xf32, #tpu.memory_space<vmem>>, vector<128x128xf32>
    %c0_4 = arith.constant 0 : index
    %c0_5 = arith.constant 0 : index
    %5 = vector.load %arg3[%c0_4, %c0_5] : memref<128x128xbf16, #tpu.memory_space<vmem>>, vector<128x128xbf16>
    %cst = arith.constant dense<0.000000e+00> : vector<128x128xf32>
    %6 = tpu.matmul %3, %5, %cst {dimension_numbers = #tpu.dot_dimension_numbers<[1], [0], [0], [1], [0, 0, 1, 1], [], []>} : vector<128x128xbf16>, vector<128x128xbf16>, vector<128x128xf32> -> vector<128x128xf32>
    %7 = arith.addf %4, %6 : vector<128x128xf32>
    %c0_6 = arith.constant 0 : index
    %c0_7 = arith.constant 0 : index
    %8 = vector.load %arg10[%c0_6, %c0_7] : memref<128x128xf32, #tpu.memory_space<vmem>>, vector<128x128xf32>
    tpu.vector_store %arg10[%c0_6, %c0_7], %7 {strides = array<i32>} : memref<128x128xf32, #tpu.memory_space<vmem>>, vector<128x128xf32>,
    %c0_8 = arith.constant 0 : index
    %c0_9 = arith.constant 0 : index
    %9 = vector.load %arg11[%c0_8, %c0_9] : memref<128x1xf32, #tpu.memory_space<vmem>>, vector<128x1xf32>
    %10 = arith.extf %3 : vector<128x128xbf16> to vector<128x128xf32>
    %cst_10 = arith.constant dense<0.000000e+00> : vector<128xf32>
    %11 = vector.multi_reduction <add>, %10, %cst_10 [1] : vector<128x128xf32> to vector<128xf32>
    %12 = vector.shape_cast %11 : vector<128xf32> to vector<128x1xf32>
    %13 = arith.addf %9, %12 : vector<128x1xf32>
    %c0_11 = arith.constant 0 : index
    %c0_12 = arith.constant 0 : index
    %14 = vector.load %arg11[%c0_11, %c0_12] : memref<128x1xf32, #tpu.memory_space<vmem>>, vector<128x1xf32>
    tpu.vector_store %arg11[%c0_11, %c0_12], %13 {strides = array<i32>} : memref<128x1xf32, #tpu.memory_space<vmem>>, vector<128x1xf32>,
    %c1_i32 = arith.constant 1 : i32
    %15 = arith.cmpi eq, %arg1, %c1_i32 : i32
    %16 = arith.extui %15 : i1 to i32
    %c0_i32_13 = arith.constant 0 : i32
    %17 = arith.cmpi ne, %16, %c0_i32_13 : i32
    scf.if %17 {
      %c0_14 = arith.constant 0 : index
      %c0_15 = arith.constant 0 : index
      %18 = vector.load %arg10[%c0_14, %c0_15] : memref<128x128xf32, #tpu.memory_space<vmem>>, vector<128x128xf32>
      %19 = arith.truncf %18 : vector<128x128xf32> to vector<128x128xbf16>
      %c0_16 = arith.constant 0 : index
      %c0_17 = arith.constant 0 : index
      %20 = vector.load %arg4[%c0_16, %c0_17] : memref<128x128xbf16, #tpu.memory_space<vmem>>, vector<128x128xbf16>
      %cst_18 = arith.constant dense<0.000000e+00> : vector<128x128xf32>
      %21 = tpu.matmul %19, %20, %cst_18 {dimension_numbers = #tpu.dot_dimension_numbers<[1], [0], [0], [1], [0, 0, 1, 1], [], []>} : vector<128x128xbf16>, vector<128x128xbf16>, vector<128x128xf32> -> vector<128x128xf32>
      %c0_19 = arith.constant 0 : index
      %c0_20 = arith.constant 0 : index
      %22 = vector.load %arg11[%c0_19, %c0_20] : memref<128x1xf32, #tpu.memory_space<vmem>>, vector<128x1xf32>
      %c0_21 = arith.constant 0 : index
      %c0_22 = arith.constant 0 : index
      %23 = vector.load %arg5[%c0_21, %c0_22] : memref<1x128xf32, #tpu.memory_space<vmem>>, vector<1x128xf32>
      %24 = vector.broadcast %22 : vector<128x1xf32> to vector<128x128xf32>
      %25 = vector.broadcast %23 : vector<1x128xf32> to vector<128x128xf32>
      %26 = arith.mulf %24, %25 : vector<128x128xf32>
      %27 = arith.addf %21, %26 : vector<128x128xf32>
      %cst_23 = arith.constant 0.000000e+00 : f32
      %28 = vector.broadcast %cst_23 : f32 to vector<128x128xf32>
      %29 = arith.maximumf %27, %28 : vector<128x128xf32>
      %c0_24 = arith.constant 0 : index
      %c0_25 = arith.constant 0 : index
      %30 = vector.load %arg8[%c0_24, %c0_25] : memref<128x128xi32, #tpu.memory_space<vmem>>, vector<128x128xi32>
      %c-2147483648_i32 = arith.constant -2147483648 : i32
      %31 = vector.broadcast %c-2147483648_i32 : i32 to vector<128x128xi32>
      %32 = arith.cmpi uge, %30, %31 : vector<128x128xi32>
      %cst_26 = arith.constant 2.000000e+00 : f32
      %33 = vector.broadcast %cst_26 : f32 to vector<128x128xf32>
      %34 = arith.mulf %29, %33 : vector<128x128xf32>
      %cst_27 = arith.constant 0.000000e+00 : f32
      %35 = vector.broadcast %cst_27 : f32 to vector<128x128xf32>
      %36 = arith.select %32, %34, %35 : vector<128x128xi1>, vector<128x128xf32>
      %37 = arith.truncf %36 : vector<128x128xf32> to vector<128x128xbf16>
      %c0_28 = arith.constant 0 : index
      %c0_29 = arith.constant 0 : index
      %38 = vector.load %arg6[%c0_28, %c0_29] : memref<128x128xbf16, #tpu.memory_space<vmem>>, vector<128x128xbf16>
      %cst_30 = arith.constant dense<0.000000e+00> : vector<128x128xf32>
      %39 = tpu.matmul %37, %38, %cst_30 {dimension_numbers = #tpu.dot_dimension_numbers<[1], [0], [0], [1], [0, 0, 1, 1], [], []>} : vector<128x128xbf16>, vector<128x128xbf16>, vector<128x128xf32> -> vector<128x128xf32>
      %c0_31 = arith.constant 0 : index
      %c0_32 = arith.constant 0 : index
      %40 = vector.load %arg7[%c0_31, %c0_32] : memref<1x128xf32, #tpu.memory_space<vmem>>, vector<1x128xf32>
      %41 = vector.broadcast %40 : vector<1x128xf32> to vector<128x128xf32>
      %42 = arith.addf %39, %41 : vector<128x128xf32>
      %c0_33 = arith.constant 0 : index
      %c0_34 = arith.constant 0 : index
      %43 = vector.load %arg9[%c0_33, %c0_34] : memref<128x128xf32, #tpu.memory_space<vmem>>, vector<128x128xf32>
      tpu.vector_store %arg9[%c0_33, %c0_34], %42 {strides = array<i32>} : memref<128x128xf32, #tpu.memory_space<vmem>>, vector<128x128xf32>,
    } else {
    }
    return
  }
  func.func @transform_0(%arg0: i32, %arg1: i32) -> (i32, i32) {
    %c0_i32 = arith.constant 0 : i32
    return %arg0, %arg1 : i32, i32
  }
  func.func @transform_1(%arg0: i32, %arg1: i32) -> (i32, i32) {
    %c0_i32 = arith.constant 0 : i32
    %c0_i32_0 = arith.constant 0 : i32
    return %arg1, %c0_i32 : i32, i32
  }
  func.func @transform_2(%arg0: i32, %arg1: i32) -> (i32, i32) {
    %c0_i32 = arith.constant 0 : i32
    %c0_i32_0 = arith.constant 0 : i32
    %c0_i32_1 = arith.constant 0 : i32
    return %c0_i32, %c0_i32_0 : i32, i32
  }
  func.func @transform_3(%arg0: i32, %arg1: i32) -> (i32, i32) {
    %c0_i32 = arith.constant 0 : i32
    %c0_i32_0 = arith.constant 0 : i32
    %c0_i32_1 = arith.constant 0 : i32
    return %c0_i32, %c0_i32_0 : i32, i32
  }
  func.func @transform_4(%arg0: i32, %arg1: i32) -> (i32, i32) {
    %c0_i32 = arith.constant 0 : i32
    %c0_i32_0 = arith.constant 0 : i32
    %c0_i32_1 = arith.constant 0 : i32
    return %c0_i32, %c0_i32_0 : i32, i32
  }
  func.func @transform_5(%arg0: i32, %arg1: i32) -> (i32, i32) {
    %c0_i32 = arith.constant 0 : i32
    %c0_i32_0 = arith.constant 0 : i32
    %c0_i32_1 = arith.constant 0 : i32
    return %c0_i32, %c0_i32_0 : i32, i32
  }
  func.func @transform_6(%arg0: i32, %arg1: i32) -> (i32, i32) {
    %c0_i32 = arith.constant 0 : i32
    %c0_i32_0 = arith.constant 0 : i32
    return %arg0, %c0_i32 : i32, i32
  }
  func.func @transform_7(%arg0: i32, %arg1: i32) -> (i32, i32) {
    %c0_i32 = arith.constant 0 : i32
    %c0_i32_0 = arith.constant 0 : i32
    return %arg0, %c0_i32 : i32, i32
  }
}

</mosaic_0001>

<llo_original>
// kernel: tpu_custom_call.1
$region0: #{tpu_custom_call.1}
  #allocation0 [shape = 'u32[]', space=smem, size = 0x4, offset = 0x4, fixed_abs, tag = 'smem constant byte address 0x4 - core index']
  #allocation1 [shape = 'u32[144,128]{1,0:T(1,128)}', space=vmem, size = 0x12000, scoped, tag = 'internal scratch']
  #allocation2 [shape = 'f32[128,128]{1,0:T(8,128)}', space=vmem, size = 0x10000, scoped, tag = 'scratch operand']
  #allocation3 [shape = 'f32[128,1]{1,0:T(8,128)}', space=vmem, size = 0x10000, scoped, tag = 'scratch operand']
  %s0 = inlined_call_operand.hbm [shape: bf16[256,256], index: 0, kind: input, shape index: {}]
  %s1 = inlined_call_operand.hbm [shape: bf16[256,128], index: 1, kind: input, shape index: {}]
  %s2 = inlined_call_operand.hbm [shape: bf16[128,128], index: 2, kind: input, shape index: {}]
  %s3 = inlined_call_operand.hbm [shape: f32[1,128], index: 3, kind: input, shape index: {}]
  %s4 = inlined_call_operand.hbm [shape: bf16[128,128], index: 4, kind: input, shape index: {}]
  %s5 = inlined_call_operand.hbm [shape: f32[1,128], index: 5, kind: input, shape index: {}]
  %s6 = inlined_call_operand.hbm [shape: u32[256,128], index: 6, kind: input, shape index: {}]
  %s7 = inlined_call_operand.hbm [shape: f32[256,128], index: 7, kind: output, shape index: {}]
  %s8 = sld [smem:[#allocation0]]
  $region97: #{tpu_custom_call.1} parent=0
    _
  %s10 = ssub.s32 1, %s8
  %s11 = scalar_select 0, %s10, %s8
  $region1: #{tpu_custom_call.1} parent=0
    #allocation4 [shape = 'u8[65536]{0}', space=vmem, size = 0x10000, scoped, tag = 'input window, operand 0']
    #allocation5 [shape = 's32[2]{0}', space=sflag, size = 0x8, scoped, tag = 'scoped memory for tpu_custom_call.1']
    #allocation6 [shape = 's32[2]{0}', space=sflag, size = 0x8, scoped, tag = 'scoped memory for tpu_custom_call.1']
    #allocation7 [shape = 'u8[65536]{0}', space=vmem, size = 0x10000, scoped, tag = 'input window, operand 1']
    #allocation8 [shape = 's32[2]{0}', space=sflag, size = 0x8, scoped, tag = 'scoped memory for tpu_custom_call.1']
    #allocation9 [shape = 'u8[32768]{0}', space=vmem, size = 0x8000, scoped, tag = 'input window, operand 2, single buffered']
    #allocation10 [shape = 'u8[512]{0}', space=vmem, size = 0x400, scoped, tag = 'input window, operand 3, single buffered']
    #allocation11 [shape = 's32[1]{0}', space=sflag, size = 0x4, scoped, tag = 'scoped memory for tpu_custom_call.1']
    #allocation12 [shape = 'u8[32768]{0}', space=vmem, size = 0x8000, scoped, tag = 'input window, operand 4, single buffered']
    #allocation13 [shape = 'u8[512]{0}', space=vmem, size = 0x400, scoped, tag = 'input window, operand 5, single buffered']
    #allocation14 [shape = 's32[1]{0}', space=sflag, size = 0x4, scoped, tag = 'scoped memory for tpu_custom_call.1']
    #allocation15 [shape = 'u8[131072]{0}', space=vmem, size = 0x20000, scoped, tag = 'input window, operand 6']
    #allocation16 [shape = 'u8[131072]{0}', space=vmem, size = 0x20000, scoped, tag = 'output window, operand 0']
    %12 = vsyncpa [#allocation5], 0
    %s13 = scalar_lea.sflag [#allocation5], 1
    %14 = vsyncpa %s13, 0
    %15 = vsyncpa [#allocation8], 0
    %s16 = scalar_lea.sflag [#allocation8], 1
    %17 = vsyncpa %s16, 0
    %18 = vsyncpa [#allocation11], 0
    %19 = vsyncpa [#allocation14], 0
    %20 = vsyncpa [#allocation6], 0
    %s21 = scalar_lea.sflag [#allocation6], 1
    %22 = vsyncpa %s21, 0
    loop: start=0, step=1, limit=6
    $region2: #{tpu_custom_call.1} parent=1 // loop_pre_header
      _
    $region3: #{tpu_custom_call.1} parent=1 // loop_header
      %s24 = sphi 0, %s28
      %p25 = scmp.ge.s32.totalorder %s24, 6
      %s31 = sphi 0, %s43
      %s32 = sphi 0, %s39
      %s33 = sphi 0, %s31
      %s34 = sphi 0, %s32
      %s35 = sphi 0, %s33
      %s36 = sphi 0, %s34
      %s48 = sphi 0, %s50
      %s51 = sphi 0, %s48
      %s52 = sphi 0, %s51
      %s68 = sphi 0, %s52
      %s74 = sphi 0, %s76
      %s77 = sphi 0, %s74
      %s78 = sphi 0, %s77
      %s94 = sphi 0, %s78
      %s98 = sphi 0, %s98
      %s100 = sphi 0, %s98
      %s101 = sphi 0, %s100
      %s115 = sphi 0, %s101
      %s119 = sphi 0, %s119
      %s121 = sphi 0, %s119
      %s122 = sphi 0, %s121
      %s136 = sphi 0, %s122
      %s140 = sphi 0, %s140
      %s142 = sphi 0, %s140
      %s143 = sphi 0, %s142
      %s157 = sphi 0, %s143
      %s161 = sphi 0, %s161
      %s163 = sphi 0, %s161
      %s164 = sphi 0, %s163
      %s178 = sphi 0, %s164
      %s184 = sphi 0, %s186
      %s187 = sphi 0, %s184
      %s188 = sphi 0, %s187
      %s204 = sphi 0, %s188
      %s210 = sphi 0, %s212
      %s213 = sphi 0, %s210
      %s214 = sphi 0, %s213
      %s230 = sphi 0, %s214
    $region4: #{tpu_custom_call.1} parent=1 // loop_header_branch
      %27 = sbr.rel (%p25) target = $region8
    $region5: #{tpu_custom_call.1} parent=1 // loop_body
      %s29 = ssub.s32 %s24, 1
      %s30 = ssub.s32 %s24, 2
      %s37 = sadd.s32 1, %s32
      %p38 = scmp.ge.s32.totalorder %s37, 2
      %s39 = scalar_select %p38, 0, %s37
      %s40 = sadd.s32 1, %s31
      %s41 = scalar_select %p38, %s40, %s31
      %p42 = scmp.ge.s32.totalorder %s41, 2
      %s43 = scalar_select %p42, 0, %s41
      %s44 = ssub.s32 %s31, %s43
      %s45 = ssub.s32 %s32, %s39
      %s46 = sor.u32 %s44, %s45
      %p47 = scmp.eq.s32.totalorder %s46, 0
      %s49 = sadd.s32 %s48, 1
      %s50 = scalar_select %p47, %s48, %s49
      %p53 = pneg %p47
      %p54 = scmp.eq.s32.totalorder %s24, 3
      %p55 = por %p53, %p54
      %p56 = scmp.ne.s32.totalorder %s48, %s51
      %p57 = scmp.eq.s32.totalorder %s24, 0
      %p58 = por %p56, %p57
      %p59 = scmp.ne.s32.totalorder %s48, %s51
      %p60 = scmp.eq.s32.totalorder %s29, 3
      %p61 = por %p59, %p60
      %p62 = scmp.ne.s32.totalorder %s51, %s52
      %p63 = scmp.eq.s32.totalorder %s29, 0
      %p64 = por %p62, %p63
      %p65 = scmp.ne.s32.totalorder %s51, %s52
      %p66 = scmp.eq.s32.totalorder %s30, 3
      %p67 = por %p65, %p66
      %p69 = scmp.ne.s32.totalorder %s52, %s68
      %p70 = scmp.eq.s32.totalorder %s30, 0
      %p71 = por %p69, %p70
      %s72 = ssub.s32 %s32, %s39
      %p73 = scmp.eq.s32.totalorder %s72, 0
      %s75 = sadd.s32 %s74, 1
      %s76 = scalar_select %p73, %s74, %s75
      %p79 = pneg %p73
      %p80 = scmp.eq.s32.totalorder %s24, 3
      %p81 = por %p79, %p80
      %p82 = scmp.ne.s32.totalorder %s74, %s77
      %p83 = scmp.eq.s32.totalorder %s24, 0
      %p84 = por %p82, %p83
      %p85 = scmp.ne.s32.totalorder %s74, %s77
      %p86 = scmp.eq.s32.totalorder %s29, 3
      %p87 = por %p85, %p86
      %p88 = scmp.ne.s32.totalorder %s77, %s78
      %p89 = scmp.eq.s32.totalorder %s29, 0
      %p90 = por %p88, %p89
      %p91 = scmp.ne.s32.totalorder %s77, %s78
      %p92 = scmp.eq.s32.totalorder %s30, 3
      %p93 = por %p91, %p92
      %p95 = scmp.ne.s32.totalorder %s78, %s94
      %p96 = scmp.eq.s32.totalorder %s30, 0
      %p97 = por %p95, %p96
      %s99 = sadd.s32 %s98, 1
      %p102 = scmp.eq.s32.totalorder %s24, 3
      %p103 = scmp.ne.s32.totalorder %s98, %s100
      %p104 = scmp.eq.s32.totalorder %s24, 0
      %p105 = por %p103, %p104
      %p106 = scmp.ne.s32.totalorder %s98, %s100
      %p107 = scmp.eq.s32.totalorder %s29, 3
      %p108 = por %p106, %p107
      %p109 = scmp.ne.s32.totalorder %s100, %s101
      %p110 = scmp.eq.s32.totalorder %s29, 0
      %p111 = por %p109, %p110
      %p112 = scmp.ne.s32.totalorder %s100, %s101
      %p113 = scmp.eq.s32.totalorder %s30, 3
      %p114 = por %p112, %p113
      %p116 = scmp.ne.s32.totalorder %s101, %s115
      %p117 = scmp.eq.s32.totalorder %s30, 0
      %p118 = por %p116, %p117
      %s120 = sadd.s32 %s119, 1
      %p123 = scmp.eq.s32.totalorder %s24, 3
      %p124 = scmp.ne.s32.totalorder %s119, %s121
      %p125 = scmp.eq.s32.totalorder %s24, 0
      %p126 = por %p124, %p125
      %p127 = scmp.ne.s32.totalorder %s119, %s121
      %p128 = scmp.eq.s32.totalorder %s29, 3
      %p129 = por %p127, %p128
      %p130 = scmp.ne.s32.totalorder %s121, %s122
      %p131 = scmp.eq.s32.totalorder %s29, 0
      %p132 = por %p130, %p131
      %p133 = scmp.ne.s32.totalorder %s121, %s122
      %p134 = scmp.eq.s32.totalorder %s30, 3
      %p135 = por %p133, %p134
      %p137 = scmp.ne.s32.totalorder %s122, %s136
      %p138 = scmp.eq.s32.totalorder %s30, 0
      %p139 = por %p137, %p138
      %s141 = sadd.s32 %s140, 1
      %p144 = scmp.eq.s32.totalorder %s24, 3
      %p145 = scmp.ne.s32.totalorder %s140, %s142
      %p146 = scmp.eq.s32.totalorder %s24, 0
      %p147 = por %p145, %p146
      %p148 = scmp.ne.s32.totalorder %s140, %s142
      %p149 = scmp.eq.s32.totalorder %s29, 3
      %p150 = por %p148, %p149
      %p151 = scmp.ne.s32.totalorder %s142, %s143
      %p152 = scmp.eq.s32.totalorder %s29, 0
      %p153 = por %p151, %p152
      %p154 = scmp.ne.s32.totalorder %s142, %s143
      %p155 = scmp.eq.s32.totalorder %s30, 3
      %p156 = por %p154, %p155
      %p158 = scmp.ne.s32.totalorder %s143, %s157
      %p159 = scmp.eq.s32.totalorder %s30, 0
      %p160 = por %p158, %p159
      %s162 = sadd.s32 %s161, 1
      %p165 = scmp.eq.s32.totalorder %s24, 3
      %p166 = scmp.ne.s32.totalorder %s161, %s163
      %p167 = scmp.eq.s32.totalorder %s24, 0
      %p168 = por %p166, %p167
      %p169 = scmp.ne.s32.totalorder %s161, %s163
      %p170 = scmp.eq.s32.totalorder %s29, 3
      %p171 = por %p169, %p170
      %p172 = scmp.ne.s32.totalorder %s163, %s164
      %p173 = scmp.eq.s32.totalorder %s29, 0
      %p174 = por %p172, %p173
      %p175 = scmp.ne.s32.totalorder %s163, %s164
      %p176 = scmp.eq.s32.totalorder %s30, 3
      %p177 = por %p175, %p176
      %p179 = scmp.ne.s32.totalorder %s164, %s178
      %p180 = scmp.eq.s32.totalorder %s30, 0
      %p181 = por %p179, %p180
      %s182 = ssub.s32 %s31, %s43
      %p183 = scmp.eq.s32.totalorder %s182, 0
      %s185 = sadd.s32 %s184, 1
      %s186 = scalar_select %p183, %s184, %s185
      %p189 = pneg %p183
      %p190 = scmp.eq.s32.totalorder %s24, 3
      %p191 = por %p189, %p190
      %p192 = scmp.ne.s32.totalorder %s184, %s187
      %p193 = scmp.eq.s32.totalorder %s24, 0
      %p194 = por %p192, %p193
      %p195 = scmp.ne.s32.totalorder %s184, %s187
      %p196 = scmp.eq.s32.totalorder %s29, 3
      %p197 = por %p195, %p196
      %p198 = scmp.ne.s32.totalorder %s187, %s188
      %p199 = scmp.eq.s32.totalorder %s29, 0
      %p200 = por %p198, %p199
      %p201 = scmp.ne.s32.totalorder %s187, %s188
      %p202 = scmp.eq.s32.totalorder %s30, 3
      %p203 = por %p201, %p202
      %p205 = scmp.ne.s32.totalorder %s188, %s204
      %p206 = scmp.eq.s32.totalorder %s30, 0
      %p207 = por %p205, %p206
      %s208 = ssub.s32 %s31, %s43
      %p209 = scmp.eq.s32.totalorder %s208, 0
      %s211 = sadd.s32 %s210, 1
      %s212 = scalar_select %p209, %s210, %s211
      %p215 = pneg %p209
      %p216 = scmp.eq.s32.totalorder %s24, 3
      %p217 = por %p215, %p216
      %p218 = scmp.ne.s32.totalorder %s210, %s213
      %p219 = scmp.eq.s32.totalorder %s24, 0
      %p220 = por %p218, %p219
      %p221 = scmp.ne.s32.totalorder %s210, %s213
      %p222 = scmp.eq.s32.totalorder %s29, 3
      %p223 = por %p221, %p222
      %p224 = scmp.ne.s32.totalorder %s213, %s214
      %p225 = scmp.eq.s32.totalorder %s29, 0
      %p226 = por %p224, %p225
      %p227 = scmp.ne.s32.totalorder %s213, %s214
      %p228 = scmp.eq.s32.totalorder %s30, 3
      %p229 = por %p227, %p228
      %p231 = scmp.ne.s32.totalorder %s214, %s230
      %p232 = scmp.eq.s32.totalorder %s30, 0
      %p233 = por %p231, %p232
      %p234 = scmp.le.s32.totalorder 1, %s24
      %p235 = scmp.lt.s32.totalorder %s24, 5
      %p236 = pnand %p234, %p235
      %p237 = pneg %p236
      // Predicated region
      $region9: #{tpu_custom_call.1} parent=5 // pred_check
        _
      $region10: #{tpu_custom_call.1} parent=5 // pred_check_branch
        %239 = sbr.rel (%p236) target = $region12
      $region11: #{tpu_custom_call.1} parent=5 // pred_region
        %s240 = ssub.s32 %s24, 1
        // Predicated region
        $region13: #{tpu_custom_call.1} parent=11 // pred_check
          %p241 = pneg %p111
        $region14: #{tpu_custom_call.1} parent=11 // pred_check_branch
          %243 = sbr.rel (%p241) target = $region16
        $region15: #{tpu_custom_call.1} parent=11 // pred_region
          %s245 = ssub.s32 1024, 1024
          %246 = vsyncadd [#allocation8], %s245
          %s247 = sshll.u32 [#allocation9], 4
          %s248 = int_to_ptr.vmem [resolvable:$true] %s247
          %253 = dma.hbm_to_vmem [thread:$0]  %s2, 1024, %s248, [#allocation8], 64, 64, 4
        $region16: #{tpu_custom_call.1} parent=11 // pred_fallthru
          _
        // Predicated region
        $region17: #{tpu_custom_call.1} parent=11 // pred_check
          %p254 = pneg %p132
        $region18: #{tpu_custom_call.1} parent=11 // pred_check_branch
          %256 = sbr.rel (%p254) target = $region20
        $region19: #{tpu_custom_call.1} parent=11 // pred_region
          %s258 = ssub.s32 16, 16
          %259 = vsyncadd [#allocation11], %s258
          %s261 = sshll.u32 [#allocation10], 4
          %s262 = int_to_ptr.vmem [resolvable:$true] %s261
          %264 = dma.hbm_to_vmem [thread:$0]  %s3, 16, %s262, [#allocation11]
        $region20: #{tpu_custom_call.1} parent=11 // pred_fallthru
          _
        // Predicated region
        $region21: #{tpu_custom_call.1} parent=11 // pred_check
          %p265 = pneg %p153
        $region22: #{tpu_custom_call.1} parent=11 // pred_check_branch
          %267 = sbr.rel (%p265) target = $region24
        $region23: #{tpu_custom_call.1} parent=11 // pred_region
          %s269 = ssub.s32 1024, 1024
          %270 = vsyncadd [#allocation11], %s269
          %s271 = sshll.u32 [#allocation12], 4
          %s272 = int_to_ptr.vmem [resolvable:$true] %s271
          %277 = dma.hbm_to_vmem [thread:$0]  %s4, 1024, %s272, [#allocation11], 64, 64, 4
        $region24: #{tpu_custom_call.1} parent=11 // pred_fallthru
          _
        // Predicated region
        $region25: #{tpu_custom_call.1} parent=11 // pred_check
          %p278 = pneg %p174
        $region26: #{tpu_custom_call.1} parent=11 // pred_check_branch
          %280 = sbr.rel (%p278) target = $region28
        $region27: #{tpu_custom_call.1} parent=11 // pred_region
          %s282 = ssub.s32 16, 16
          %283 = vsyncadd [#allocation14], %s282
          %s285 = sshll.u32 [#allocation13], 4
          %s286 = int_to_ptr.vmem [resolvable:$true] %s285
          %288 = dma.hbm_to_vmem [thread:$0]  %s5, 16, %s286, [#allocation14]
        $region28: #{tpu_custom_call.1} parent=11 // pred_fallthru
          _
      $region12: #{tpu_custom_call.1} parent=5 // pred_fallthru
        _
      %p289 = scmp.lt.s32.totalorder %s24, 4
      // Predicated region
      $region29: #{tpu_custom_call.1} parent=5 // pred_check
        %p290 = pneg %p289
      $region30: #{tpu_custom_call.1} parent=5 // pred_check_branch
        %292 = sbr.rel (%p290) target = $region32
      $region31: #{tpu_custom_call.1} parent=5 // pred_region
        // Predicated region
        $region33: #{tpu_custom_call.1} parent=31 // pred_check
          %p293 = pneg %p58
        $region34: #{tpu_custom_call.1} parent=31 // pred_check_branch
          %295 = sbr.rel (%p293) target = $region36
        $region35: #{tpu_custom_call.1} parent=31 // pred_region
          %s296 = sand.u32 %s24, 1
          %s297 = scalar_lea.sflag [#allocation5], %s296
          %s298 = sand.u32 %s48, 1
          %s299 = smul.addr %s298, 64
          %s300 = scalar_lea.vmem [#allocation4], %s299
          %s301 = smul.u32 16, %s31
          %s303 = ssub.s32 1024, 1024
          %304 = vsyncadd %s297, %s303
          %s305 = smul.addr %s301, 2
          %s306 = sadd.s32 %s32, %s305
          %s307 = smul.addr %s306, 64
          %s308 = scalar_lea.hbm %s0, %s307
          %s309 = sshll.u32 %s300, 4
          %s310 = int_to_ptr.vmem [resolvable:$true] %s309
          %315 = dma.hbm_to_vmem [thread:$0]  %s308, 1024, %s310, %s297, 128, 64, 4
        $region36: #{tpu_custom_call.1} parent=31 // pred_fallthru
          _
        // Predicated region
        $region37: #{tpu_custom_call.1} parent=31 // pred_check
          %p316 = pneg %p84
        $region38: #{tpu_custom_call.1} parent=31 // pred_check_branch
          %318 = sbr.rel (%p316) target = $region40
        $region39: #{tpu_custom_call.1} parent=31 // pred_region
          %s319 = sand.u32 %s24, 1
          %s320 = scalar_lea.sflag [#allocation8], %s319
          %s321 = sand.u32 %s74, 1
          %s322 = smul.addr %s321, 64
          %s323 = scalar_lea.vmem [#allocation7], %s322
          %s324 = smul.u32 16, %s32
          %s326 = ssub.s32 1024, 1024
          %327 = vsyncadd %s320, %s326
          %s328 = smul.addr %s324, 64
          %s329 = scalar_lea.hbm %s1, %s328
          %s330 = sshll.u32 %s323, 4
          %s331 = int_to_ptr.vmem [resolvable:$true] %s330
          %336 = dma.hbm_to_vmem [thread:$0]  %s329, 1024, %s331, %s320, 64, 64, 4
        $region40: #{tpu_custom_call.1} parent=31 // pred_fallthru
          _
        // Predicated region
        $region41: #{tpu_custom_call.1} parent=31 // pred_check
          %p337 = pneg %p194
        $region42: #{tpu_custom_call.1} parent=31 // pred_check_branch
          %339 = sbr.rel (%p337) target = $region44
        $region43: #{tpu_custom_call.1} parent=31 // pred_region
          %s340 = sand.u32 %s24, 1
          %s341 = scalar_lea.sflag [#allocation5], %s340
          %s342 = sand.u32 %s184, 1
          %s343 = smul.addr %s342, 128
          %s344 = scalar_lea.vmem [#allocation15], %s343
          %s345 = smul.u32 16, %s31
          %s347 = ssub.s32 2048, 2048
          %348 = vsyncadd %s341, %s347
          %s349 = smul.addr %s345, 128
          %s350 = scalar_lea.hbm %s6, %s349
          %s351 = sshll.u32 %s344, 4
          %s352 = int_to_ptr.vmem [resolvable:$true] %s351
          %357 = dma.hbm_to_vmem [thread:$0]  %s350, 2048, %s352, %s341, 128, 128, 8
        $region44: #{tpu_custom_call.1} parent=31 // pred_fallthru
          _
      $region32: #{tpu_custom_call.1} parent=5 // pred_fallthru
        _
      %p358 = scmp.le.s32.totalorder 1, %s24
      %p359 = scmp.lt.s32.totalorder %s24, 5
      %p360 = pnand %p358, %p359
      %p361 = pneg %p360
      // Predicated region
      $region45: #{tpu_custom_call.1} parent=5 // pred_check
        _
      $region46: #{tpu_custom_call.1} parent=5 // pred_check_branch
        %363 = sbr.rel (%p360) target = $region48
      $region47: #{tpu_custom_call.1} parent=5 // pred_region
        %s364 = ssub.s32 %s24, 1
        %s365 = sand.u32 %s29, 1
        %s366 = scalar_lea.sflag [#allocation5], %s365
        %s367 = sand.u32 %s51, 1
        %s368 = smul.addr %s367, 64
        %s369 = scalar_lea.vmem [#allocation4], %s368
        // Predicated region
        $region49: #{tpu_custom_call.1} parent=47 // pred_check
          %p370 = pneg %p64
        $region50: #{tpu_custom_call.1} parent=47 // pred_check_branch
          %372 = sbr.rel (%p370) target = $region52
        $region51: #{tpu_custom_call.1} parent=47 // pred_region
          %373 = dma.done %s366, 1024
        $region52: #{tpu_custom_call.1} parent=47 // pred_fallthru
          _
        %s374 = sand.u32 %s29, 1
        %s375 = scalar_lea.sflag [#allocation8], %s374
        %s376 = sand.u32 %s77, 1
        %s377 = smul.addr %s376, 64
        %s378 = scalar_lea.vmem [#allocation7], %s377
        // Predicated region
        $region53: #{tpu_custom_call.1} parent=47 // pred_check
          %p379 = pneg %p90
        $region54: #{tpu_custom_call.1} parent=47 // pred_check_branch
          %381 = sbr.rel (%p379) target = $region56
        $region55: #{tpu_custom_call.1} parent=47 // pred_region
          %382 = dma.done %s375, 1024
        $region56: #{tpu_custom_call.1} parent=47 // pred_fallthru
          _
        // Predicated region
        $region57: #{tpu_custom_call.1} parent=47 // pred_check
          %p383 = pneg %p111
        $region58: #{tpu_custom_call.1} parent=47 // pred_check_branch
          %385 = sbr.rel (%p383) target = $region60
        $region59: #{tpu_custom_call.1} parent=47 // pred_region
          %386 = dma.done [#allocation8], 1024
        $region60: #{tpu_custom_call.1} parent=47 // pred_fallthru
          _
        // Predicated region
        $region61: #{tpu_custom_call.1} parent=47 // pred_check
          %p387 = pneg %p132
        $region62: #{tpu_custom_call.1} parent=47 // pred_check_branch
          %389 = sbr.rel (%p387) target = $region64
        $region63: #{tpu_custom_call.1} parent=47 // pred_region
          %390 = dma.done [#allocation11], 16
        $region64: #{tpu_custom_call.1} parent=47 // pred_fallthru
          _
        // Predicated region
        $region65: #{tpu_custom_call.1} parent=47 // pred_check
          %p391 = pneg %p153
        $region66: #{tpu_custom_call.1} parent=47 // pred_check_branch
          %393 = sbr.rel (%p391) target = $region68
        $region67: #{tpu_custom_call.1} parent=47 // pred_region
          %394 = dma.done [#allocation11], 1024
        $region68: #{tpu_custom_call.1} parent=47 // pred_fallthru
          _
        // Predicated region
        $region69: #{tpu_custom_call.1} parent=47 // pred_check
          %p395 = pneg %p174
        $region70: #{tpu_custom_call.1} parent=47 // pred_check_branch
          %397 = sbr.rel (%p395) target = $region72
        $region71: #{tpu_custom_call.1} parent=47 // pred_region
          %398 = dma.done [#allocation14], 16
        $region72: #{tpu_custom_call.1} parent=47 // pred_fallthru
          _
        %s399 = sand.u32 %s29, 1
        %s400 = scalar_lea.sflag [#allocation5], %s399
        %s401 = sand.u32 %s187, 1
        %s402 = smul.addr %s401, 128
        %s403 = scalar_lea.vmem [#allocation15], %s402
        // Predicated region
        $region73: #{tpu_custom_call.1} parent=47 // pred_check
          %p404 = pneg %p200
        $region74: #{tpu_custom_call.1} parent=47 // pred_check_branch
          %406 = sbr.rel (%p404) target = $region76
        $region75: #{tpu_custom_call.1} parent=47 // pred_region
          %407 = dma.done %s400, 2048
        $region76: #{tpu_custom_call.1} parent=47 // pred_fallthru
          _
        %s408 = sand.u32 %s29, 1
        %s409 = scalar_lea.sflag [#allocation5], %s408
        %s410 = sand.u32 %s51, 1
        %s411 = smul.addr %s410, 64
        %s412 = scalar_lea.vmem [#allocation4], %s411
        %p413 = pneg %p64
        %p414 = pneg %p61
        %s415 = sand.u32 %s29, 1
        %s416 = scalar_lea.sflag [#allocation8], %s415
        %s417 = sand.u32 %s77, 1
        %s418 = smul.addr %s417, 64
        %s419 = scalar_lea.vmem [#allocation7], %s418
        %p420 = pneg %p90
        %p421 = pneg %p87
        %p422 = pneg %p111
        %p423 = pneg %p108
        %p424 = pneg %p132
        %p425 = pneg %p129
        %p426 = pneg %p153
        %p427 = pneg %p150
        %p428 = pneg %p174
        %p429 = pneg %p171
        %s430 = sand.u32 %s29, 1
        %s431 = scalar_lea.sflag [#allocation5], %s430
        %s432 = sand.u32 %s187, 1
        %s433 = smul.addr %s432, 128
        %s434 = scalar_lea.vmem [#allocation15], %s433
        %p435 = pneg %p200
        %p436 = pneg %p197
        %p437 = pneg %p226
        %p438 = pneg %p223
        %s439 = sand.u32 %s213, 1
        %s440 = scalar_lea.sflag [#allocation6], %s439
        %s441 = sand.u32 %s213, 1
        %s442 = smul.addr %s441, 128
        %s443 = scalar_lea.vmem [#allocation16], %s442
        %s444 = smul.u32 16, %s33
        %s445 = smul.u32 16, %s34
        %s446 = smul.u32 16, %s33
        %s447 = smul.u32 16, %s33
        %p449 = scmp.eq.s32.totalorder %s34, 0
        // Predicated region
        $region77: #{tpu_custom_call.1} parent=47 // pred_check
          %p450 = pneg %p449
        $region78: #{tpu_custom_call.1} parent=47 // pred_check_branch
          %452 = sbr.rel (%p450) target = $region80
        $region79: #{tpu_custom_call.1} parent=47 // pred_region
          %453 = vst [vmem:[#allocation2] sm:$0xff] 0.0
          %454 = vst [vmem:[#allocation2 + $0x8] sm:$0xff] 0.0
          %455 = vst [vmem:[#allocation2 + $0x10] sm:$0xff] 0.0
          %456 = vst [vmem:[#allocation2 + $0x18] sm:$0xff] 0.0
          %457 = vst [vmem:[#allocation2 + $0x20] sm:$0xff] 0.0
          %458 = vst [vmem:[#allocation2 + $0x28] sm:$0xff] 0.0
          %459 = vst [vmem:[#allocation2 + $0x30] sm:$0xff] 0.0
          %460 = vst [vmem:[#allocation2 + $0x38] sm:$0xff] 0.0
          %461 = vst [vmem:[#allocation2 + $0x40] sm:$0xff] 0.0
          %462 = vst [vmem:[#allocation2 + $0x48] sm:$0xff] 0.0
          %463 = vst [vmem:[#allocation2 + $0x50] sm:$0xff] 0.0
          %464 = vst [vmem:[#allocation2 + $0x58] sm:$0xff] 0.0
          %465 = vst [vmem:[#allocation2 + $0x60] sm:$0xff] 0.0
          %466 = vst [vmem:[#allocation2 + $0x68] sm:$0xff] 0.0
          %467 = vst [vmem:[#allocation2 + $0x70] sm:$0xff] 0.0
          %468 = vst [vmem:[#allocation2 + $0x78] sm:$0xff] 0.0
          %vm469 = vcmask 7168
          %470 = vst.msk [vmem:[#allocation3] sm:$0xff] %vm469, 0.0
          %471 = vst.msk [vmem:[#allocation3 + $0x8] sm:$0xff] %vm469, 0.0
          %472 = vst.msk [vmem:[#allocation3 + $0x10] sm:$0xff] %vm469, 0.0
          %473 = vst.msk [vmem:[#allocation3 + $0x18] sm:$0xff] %vm469, 0.0
          %474 = vst.msk [vmem:[#allocation3 + $0x20] sm:$0xff] %vm469, 0.0
          %475 = vst.msk [vmem:[#allocation3 + $0x28] sm:$0xff] %vm469, 0.0
          %476 = vst.msk [vmem:[#allocation3 + $0x30] sm:$0xff] %vm469, 0.0
          %477 = vst.msk [vmem:[#allocation3 + $0x38] sm:$0xff] %vm469, 0.0
          %478 = vst.msk [vmem:[#allocation3 + $0x40] sm:$0xff] %vm469, 0.0
          %479 = vst.msk [vmem:[#allocation3 + $0x48] sm:$0xff] %vm469, 0.0
          %480 = vst.msk [vmem:[#allocation3 + $0x50] sm:$0xff] %vm469, 0.0
          %481 = vst.msk [vmem:[#allocation3 + $0x58] sm:$0xff] %vm469, 0.0
          %482 = vst.msk [vmem:[#allocation3 + $0x60] sm:$0xff] %vm469, 0.0
          %483 = vst.msk [vmem:[#allocation3 + $0x68] sm:$0xff] %vm469, 0.0
          %484 = vst.msk [vmem:[#allocation3 + $0x70] sm:$0xff] %vm469, 0.0
          %485 = vst.msk [vmem:[#allocation3 + $0x78] sm:$0xff] %vm469, 0.0
        $region80: #{tpu_custom_call.1} parent=47 // pred_fallthru
          _
        %v486 = vld [vmem:[%s369] sm:$0xf]
        %v487 = vld [vmem:[%s369 + $0x4] sm:$0xf]
        %v488 = vld [vmem:[%s369 + $0x8] sm:$0xf]
        %v489 = vld [vmem:[%s369 + $0xc] sm:$0xf]
        %v490 = vld [vmem:[%s369 + $0x10] sm:$0xf]
        %v491 = vld [vmem:[%s369 + $0x14] sm:$0xf]
        %v492 = vld [vmem:[%s369 + $0x18] sm:$0xf]
        %v493 = vld [vmem:[%s369 + $0x1c] sm:$0xf]
        %v494 = vld [vmem:[%s369 + $0x20] sm:$0xf]
        %v495 = vld [vmem:[%s369 + $0x24] sm:$0xf]
        %v496 = vld [vmem:[%s369 + $0x28] sm:$0xf]
        %v497 = vld [vmem:[%s369 + $0x2c] sm:$0xf]
        %v498 = vld [vmem:[%s369 + $0x30] sm:$0xf]
        %v499 = vld [vmem:[%s369 + $0x34] sm:$0xf]
        %v500 = vld [vmem:[%s369 + $0x38] sm:$0xf]
        %v501 = vld [vmem:[%s369 + $0x3c] sm:$0xf]
        %v502 = vld [vmem:[#allocation2] sm:$0xff]
        %v503 = vld [vmem:[#allocation2 + $0x8] sm:$0xff]
        %v504 = vld [vmem:[#allocation2 + $0x10] sm:$0xff]
        %v505 = vld [vmem:[#allocation2 + $0x18] sm:$0xff]
        %v506 = vld [vmem:[#allocation2 + $0x20] sm:$0xff]
        %v507 = vld [vmem:[#allocation2 + $0x28] sm:$0xff]
        %v508 = vld [vmem:[#allocation2 + $0x30] sm:$0xff]
        %v509 = vld [vmem:[#allocation2 + $0x38] sm:$0xff]
        %v510 = vld [vmem:[#allocation2 + $0x40] sm:$0xff]
        %v511 = vld [vmem:[#allocation2 + $0x48] sm:$0xff]
        %v512 = vld [vmem:[#allocation2 + $0x50] sm:$0xff]
        %v513 = vld [vmem:[#allocation2 + $0x58] sm:$0xff]
        %v514 = vld [vmem:[#allocation2 + $0x60] sm:$0xff]
        %v515 = vld [vmem:[#allocation2 + $0x68] sm:$0xff]
        %v516 = vld [vmem:[#allocation2 + $0x70] sm:$0xff]
        %v517 = vld [vmem:[#allocation2 + $0x78] sm:$0xff]
        %v518 = vld [vmem:[%s378] sm:$0xf]
        %v519 = vld [vmem:[%s378 + $0x4] sm:$0xf]
        %v520 = vld [vmem:[%s378 + $0x8] sm:$0xf]
        %v521 = vld [vmem:[%s378 + $0xc] sm:$0xf]
        %v522 = vld [vmem:[%s378 + $0x10] sm:$0xf]
        %v523 = vld [vmem:[%s378 + $0x14] sm:$0xf]
        %v524 = vld [vmem:[%s378 + $0x18] sm:$0xf]
        %v525 = vld [vmem:[%s378 + $0x1c] sm:$0xf]
        %v526 = vld [vmem:[%s378 + $0x20] sm:$0xf]
        %v527 = vld [vmem:[%s378 + $0x24] sm:$0xf]
        %v528 = vld [vmem:[%s378 + $0x28] sm:$0xf]
        %v529 = vld [vmem:[%s378 + $0x2c] sm:$0xf]
        %v530 = vld [vmem:[%s378 + $0x30] sm:$0xf]
        %v531 = vld [vmem:[%s378 + $0x34] sm:$0xf]
        %v532 = vld [vmem:[%s378 + $0x38] sm:$0xf]
        %v533 = vld [vmem:[%s378 + $0x3c] sm:$0xf]
        %v550 = vunpack.c.l.b16 %v486
        %v551 = vunpack.c.l.b16 %v487
        %v552 = vunpack.c.l.b16 %v488
        %v553 = vunpack.c.l.b16 %v489
        %v554 = vunpack.c.l.b16 %v490
        %v555 = vunpack.c.l.b16 %v491
        %v556 = vunpack.c.l.b16 %v492
        %v557 = vunpack.c.l.b16 %v493
        %v558 = vunpack.c.l.b16 %v494
        %v559 = vunpack.c.l.b16 %v495
        %v560 = vunpack.c.l.b16 %v496
        %v561 = vunpack.c.l.b16 %v497
        %v562 = vunpack.c.l.b16 %v498
        %v563 = vunpack.c.l.b16 %v499
        %v564 = vunpack.c.l.b16 %v500
        %v565 = vunpack.c.l.b16 %v501
        %v566 = vpack.c.b16 %v551, %v550
        %v567 = vpack.c.b16 %v553, %v552
        %v568 = vpack.c.b16 %v555, %v554
        %v569 = vpack.c.b16 %v557, %v556
        %v570 = vpack.c.b16 %v559, %v558
        %v571 = vpack.c.b16 %v561, %v560
        %v572 = vpack.c.b16 %v563, %v562
        %v573 = vpack.c.b16 %v565, %v564
        %v598 = vunpack.c.l.b16 %v518
        %v599 = vunpack.c.l.b16 %v519
        %v600 = vunpack.c.l.b16 %v520
        %v601 = vunpack.c.l.b16 %v521
        %v602 = vunpack.c.l.b16 %v522
        %v603 = vunpack.c.l.b16 %v523
        %v604 = vunpack.c.l.b16 %v524
        %v605 = vunpack.c.l.b16 %v525
        %v606 = vunpack.c.l.b16 %v526
        %v607 = vunpack.c.l.b16 %v527
        %v608 = vunpack.c.l.b16 %v528
        %v609 = vunpack.c.l.b16 %v529
        %v610 = vunpack.c.l.b16 %v530
        %v611 = vunpack.c.l.b16 %v531
        %v612 = vunpack.c.l.b16 %v532
        %v613 = vunpack.c.l.b16 %v533
        %v614 = vpack.c.b16 %v599, %v598
        %v615 = vpack.c.b16 %v601, %v600
        %v616 = vpack.c.b16 %v603, %v602
        %v617 = vpack.c.b16 %v605, %v604
        %v618 = vpack.c.b16 %v607, %v606
        %v619 = vpack.c.b16 %v609, %v608
        %v620 = vpack.c.b16 %v611, %v610
        %v621 = vpack.c.b16 %v613, %v612
        %630 = vmatprep.subr.bf16.mxu0 0
        %631 = vmatpush1.bf16.msra.mxu0 %v614
        %632 = vmatprep.subr.bf16.mxu0 0
        %633 = vmatpush1.bf16.msra.mxu0 %v615
        %634 = vmatprep.subr.bf16.mxu0 0
        %635 = vmatpush1.bf16.msra.mxu0 %v616
        %636 = vmatprep.subr.bf16.mxu0 0
        %637 = vmatpush1.bf16.msra.mxu0 %v617
        %638 = vmatprep.subr.bf16.mxu0 0
        %639 = vmatpush1.bf16.msra.mxu0 %v618
        %640 = vmatprep.subr.bf16.mxu0 0
        %641 = vmatpush1.bf16.msra.mxu0 %v619
        %642 = vmatprep.subr.bf16.mxu0 0
        %643 = vmatpush1.bf16.msra.mxu0 %v620
        %644 = vmatprep.subr.bf16.mxu0 0
        %645 = vmatpush1.bf16.msra.mxu0 %v621
        %646 = vmatprep.subr.bf16.mxu0 0
        %647 = vmatpush1.bf16.msra.mxu0 0
        %648 = vmatprep.subr.bf16.mxu0 0
        %649 = vmatpush1.bf16.msra.mxu0 0
        %650 = vmatprep.subr.bf16.mxu0 0
        %651 = vmatpush1.bf16.msra.mxu0 0
        %652 = vmatprep.subr.bf16.mxu0 0
        %653 = vmatpush1.bf16.msra.mxu0 0
        %654 = vmatprep.subr.bf16.mxu0 0
        %655 = vmatpush1.bf16.msra.mxu0 0
        %656 = vmatprep.subr.bf16.mxu0 0
        %657 = vmatpush1.bf16.msra.mxu0 0
        %658 = vmatprep.subr.bf16.mxu0 0
        %659 = vmatpush1.bf16.msra.mxu0 0
        %660 = vmatprep.subr.bf16.mxu0 0
        %661 = vmatpush1.bf16.msra.mxu0 0
        %662 = vmatprep.mubr.bf16.mxu0 0
        %663 = vmatmul.mubr.bf16.gmra.mrb[0].mxu0 %v566
        %v664 = vpop.f32.mrb[0].mxu0
        %v665 = vadd.f32 0.0, %v664
        %v666 = vpop.f32.mrb[0].mxu0
        %v667 = vpop.f32.mrb[0].mxu0
        %v668 = vadd.f32 0.0, %v667
        %v669 = vpop.f32.mrb[0].mxu0
        %670 = vmatprep.mubr.bf16.mxu0 0
        %671 = vmatmul.mubr.bf16.gmra.mrb[0].mxu0 %v567
        %v672 = vpop.f32.mrb[0].mxu0
        %v673 = vadd.f32 0.0, %v672
        %v674 = vpop.f32.mrb[0].mxu0
        %v675 = vpop.f32.mrb[0].mxu0
        %v676 = vadd.f32 0.0, %v675
        %v677 = vpop.f32.mrb[0].mxu0
        %678 = vmatprep.mubr.bf16.mxu0 0
        %679 = vmatmul.mubr.bf16.gmra.mrb[0].mxu0 %v568
        %v680 = vpop.f32.mrb[0].mxu0
        %v681 = vadd.f32 0.0, %v680
        %v682 = vpop.f32.mrb[0].mxu0
        %v683 = vpop.f32.mrb[0].mxu0
        %v684 = vadd.f32 0.0, %v683
        %v685 = vpop.f32.mrb[0].mxu0
        %686 = vmatprep.mubr.bf16.mxu0 0
        %687 = vmatmul.mubr.bf16.gmra.mrb[0].mxu0 %v569
        %v688 = vpop.f32.mrb[0].mxu0
        %v689 = vadd.f32 0.0, %v688
        %v690 = vpop.f32.mrb[0].mxu0
        %v691 = vpop.f32.mrb[0].mxu0
        %v692 = vadd.f32 0.0, %v691
        %v693 = vpop.f32.mrb[0].mxu0
        %694 = vmatprep.mubr.bf16.mxu0 0
        %695 = vmatmul.mubr.bf16.gmra.mrb[0].mxu0 %v570
        %v696 = vpop.f32.mrb[0].mxu0
        %v697 = vadd.f32 0.0, %v696
        %v698 = vpop.f32.mrb[0].mxu0
        %v699 = vpop.f32.mrb[0].mxu0
        %v700 = vadd.f32 0.0, %v699
        %v701 = vpop.f32.mrb[0].mxu0
        %702 = vmatprep.mubr.bf16.mxu0 0
        %703 = vmatmul.mubr.bf16.gmra.mrb[0].mxu0 %v571
        %v704 = vpop.f32.mrb[0].mxu0
        %v705 = vadd.f32 0.0, %v704
        %v706 = vpop.f32.mrb[0].mxu0
        %v707 = vpop.f32.mrb[0].mxu0
        %v708 = vadd.f32 0.0, %v707
        %v709 = vpop.f32.mrb[0].mxu0
        %710 = vmatprep.mubr.bf16.mxu0 0
        %711 = vmatmul.mubr.bf16.gmra.mrb[0].mxu0 %v572
        %v712 = vpop.f32.mrb[0].mxu0
        %v713 = vadd.f32 0.0, %v712
        %v714 = vpop.f32.mrb[0].mxu0
        %v715 = vpop.f32.mrb[0].mxu0
        %v716 = vadd.f32 0.0, %v715
        %v717 = vpop.f32.mrb[0].mxu0
        %718 = vmatprep.mubr.bf16.mxu0 0
        %719 = vmatmul.mubr.bf16.gmra.mrb[0].mxu0 %v573
        %v720 = vpop.f32.mrb[0].mxu0
        %v721 = vadd.f32 0.0, %v720
        %v722 = vpop.f32.mrb[0].mxu0
        %v723 = vpop.f32.mrb[0].mxu0
        %v724 = vadd.f32 0.0, %v723
        %v725 = vpop.f32.mrb[0].mxu0
        %726 = vdwg.mxu0
        %v727 = vadd.f32 %v502, %v665
        %v728 = vadd.f32 %v503, %v668
        %v729 = vadd.f32 %v504, %v673
        %v730 = vadd.f32 %v505, %v676
        %v731 = vadd.f32 %v506, %v681
        %v732 = vadd.f32 %v507, %v684
        %v733 = vadd.f32 %v508, %v689
        %v734 = vadd.f32 %v509, %v692
        %v735 = vadd.f32 %v510, %v697
        %v736 = vadd.f32 %v511, %v700
        %v737 = vadd.f32 %v512, %v705
        %v738 = vadd.f32 %v513, %v708
        %v739 = vadd.f32 %v514, %v713
        %v740 = vadd.f32 %v515, %v716
        %v741 = vadd.f32 %v516, %v721
        %v742 = vadd.f32 %v517, %v724
        %743 = vst [vmem:[#allocation2] sm:$0xff] %v727
        %744 = vst [vmem:[#allocation2 + $0x8] sm:$0xff] %v728
        %745 = vst [vmem:[#allocation2 + $0x10] sm:$0xff] %v729
        %746 = vst [vmem:[#allocation2 + $0x18] sm:$0xff] %v730
        %747 = vst [vmem:[#allocation2 + $0x20] sm:$0xff] %v731
        %748 = vst [vmem:[#allocation2 + $0x28] sm:$0xff] %v732
        %749 = vst [vmem:[#allocation2 + $0x30] sm:$0xff] %v733
        %750 = vst [vmem:[#allocation2 + $0x38] sm:$0xff] %v734
        %751 = vst [vmem:[#allocation2 + $0x40] sm:$0xff] %v735
        %752 = vst [vmem:[#allocation2 + $0x48] sm:$0xff] %v736
        %753 = vst [vmem:[#allocation2 + $0x50] sm:$0xff] %v737
        %754 = vst [vmem:[#allocation2 + $0x58] sm:$0xff] %v738
        %755 = vst [vmem:[#allocation2 + $0x60] sm:$0xff] %v739
        %756 = vst [vmem:[#allocation2 + $0x68] sm:$0xff] %v740
        %757 = vst [vmem:[#allocation2 + $0x70] sm:$0xff] %v741
        %758 = vst [vmem:[#allocation2 + $0x78] sm:$0xff] %v742
        %v759 = vld [vmem:[#allocation3] sm:$0xff]
        %v760 = vld [vmem:[#allocation3 + $0x8] sm:$0xff]
        %v761 = vld [vmem:[#allocation3 + $0x10] sm:$0xff]
        %v762 = vld [vmem:[#allocation3 + $0x18] sm:$0xff]
        %v763 = vld [vmem:[#allocation3 + $0x20] sm:$0xff]
        %v764 = vld [vmem:[#allocation3 + $0x28] sm:$0xff]
        %v765 = vld [vmem:[#allocation3 + $0x30] sm:$0xff]
        %v766 = vld [vmem:[#allocation3 + $0x38] sm:$0xff]
        %v767 = vld [vmem:[#allocation3 + $0x40] sm:$0xff]
        %v768 = vld [vmem:[#allocation3 + $0x48] sm:$0xff]
        %v769 = vld [vmem:[#allocation3 + $0x50] sm:$0xff]
        %v770 = vld [vmem:[#allocation3 + $0x58] sm:$0xff]
        %v771 = vld [vmem:[#allocation3 + $0x60] sm:$0xff]
        %v772 = vld [vmem:[#allocation3 + $0x68] sm:$0xff]
        %v773 = vld [vmem:[#allocation3 + $0x70] sm:$0xff]
        %v774 = vld [vmem:[#allocation3 + $0x78] sm:$0xff]
        %v775 = vunpack.c.l.bf16 %v486
        %v776 = vunpack.c.l.bf16 %v487
        %v777 = vunpack.c.l.bf16 %v488
        %v778 = vunpack.c.l.bf16 %v489
        %v779 = vunpack.c.l.bf16 %v490
        %v780 = vunpack.c.l.bf16 %v491
        %v781 = vunpack.c.l.bf16 %v492
        %v782 = vunpack.c.l.bf16 %v493
        %v783 = vunpack.c.l.bf16 %v494
        %v784 = vunpack.c.l.bf16 %v495
        %v785 = vunpack.c.l.bf16 %v496
        %v786 = vunpack.c.l.bf16 %v497
        %v787 = vunpack.c.l.bf16 %v498
        %v788 = vunpack.c.l.bf16 %v499
        %v789 = vunpack.c.l.bf16 %v500
        %v790 = vunpack.c.l.bf16 %v501
        %791 = vadd.xlane.f32.xlu0 %v775
        %v792 = vpop.xlane.xlu0 %791
        %793 = vadd.xlane.f32.xlu0 %v776
        %v794 = vpop.xlane.xlu0 %793
        %795 = vadd.xlane.f32.xlu0 %v777
        %v796 = vpop.xlane.xlu0 %795
        %797 = vadd.xlane.f32.xlu0 %v778
        %v798 = vpop.xlane.xlu0 %797
        %799 = vadd.xlane.f32.xlu0 %v779
        %v800 = vpop.xlane.xlu0 %799
        %801 = vadd.xlane.f32.xlu0 %v780
        %v802 = vpop.xlane.xlu0 %801
        %803 = vadd.xlane.f32.xlu0 %v781
        %v804 = vpop.xlane.xlu0 %803
        %805 = vadd.xlane.f32.xlu0 %v782
        %v806 = vpop.xlane.xlu0 %805
        %807 = vadd.xlane.f32.xlu0 %v783
        %v808 = vpop.xlane.xlu0 %807
        %809 = vadd.xlane.f32.xlu0 %v784
        %v810 = vpop.xlane.xlu0 %809
        %811 = vadd.xlane.f32.xlu0 %v785
        %v812 = vpop.xlane.xlu0 %811
        %813 = vadd.xlane.f32.xlu0 %v786
        %v814 = vpop.xlane.xlu0 %813
        %815 = vadd.xlane.f32.xlu0 %v787
        %v816 = vpop.xlane.xlu0 %815
        %817 = vadd.xlane.f32.xlu0 %v788
        %v818 = vpop.xlane.xlu0 %817
        %819 = vadd.xlane.f32.xlu0 %v789
        %v820 = vpop.xlane.xlu0 %819
        %821 = vadd.xlane.f32.xlu0 %v790
        %v822 = vpop.xlane.xlu0 %821
        %v823 = vadd.f32 %v759, %v792
        %v824 = vadd.f32 %v760, %v794
        %v825 = vadd.f32 %v761, %v796
        %v826 = vadd.f32 %v762, %v798
        %v827 = vadd.f32 %v763, %v800
        %v828 = vadd.f32 %v764, %v802
        %v829 = vadd.f32 %v765, %v804
        %v830 = vadd.f32 %v766, %v806
        %v831 = vadd.f32 %v767, %v808
        %v832 = vadd.f32 %v768, %v810
        %v833 = vadd.f32 %v769, %v812
        %v834 = vadd.f32 %v770, %v814
        %v835 = vadd.f32 %v771, %v816
        %v836 = vadd.f32 %v772, %v818
        %v837 = vadd.f32 %v773, %v820
        %v838 = vadd.f32 %v774, %v822
        %vm839 = vcmask 7168
        %840 = vst.msk [vmem:[#allocation3] sm:$0xff] %vm839, %v823
        %841 = vst.msk [vmem:[#allocation3 + $0x8] sm:$0xff] %vm839, %v824
        %842 = vst.msk [vmem:[#allocation3 + $0x10] sm:$0xff] %vm839, %v825
        %843 = vst.msk [vmem:[#allocation3 + $0x18] sm:$0xff] %vm839, %v826
        %844 = vst.msk [vmem:[#allocation3 + $0x20] sm:$0xff] %vm839, %v827
        %845 = vst.msk [vmem:[#allocation3 + $0x28] sm:$0xff] %vm839, %v828
        %846 = vst.msk [vmem:[#allocation3 + $0x30] sm:$0xff] %vm839, %v829
        %847 = vst.msk [vmem:[#allocation3 + $0x38] sm:$0xff] %vm839, %v830
        %848 = vst.msk [vmem:[#allocation3 + $0x40] sm:$0xff] %vm839, %v831
        %849 = vst.msk [vmem:[#allocation3 + $0x48] sm:$0xff] %vm839, %v832
        %850 = vst.msk [vmem:[#allocation3 + $0x50] sm:$0xff] %vm839, %v833
        %851 = vst.msk [vmem:[#allocation3 + $0x58] sm:$0xff] %vm839, %v834
        %852 = vst.msk [vmem:[#allocation3 + $0x60] sm:$0xff] %vm839, %v835
        %853 = vst.msk [vmem:[#allocation3 + $0x68] sm:$0xff] %vm839, %v836
        %854 = vst.msk [vmem:[#allocation3 + $0x70] sm:$0xff] %vm839, %v837
        %855 = vst.msk [vmem:[#allocation3 + $0x78] sm:$0xff] %vm839, %v838
        %p856 = scmp.eq.s32.totalorder %s34, 1
        // Predicated region
        $region81: #{tpu_custom_call.1} parent=47 // pred_check
          %p857 = pneg %p856
        $region82: #{tpu_custom_call.1} parent=47 // pred_check_branch
          %859 = sbr.rel (%p857) target = $region84
        $region83: #{tpu_custom_call.1} parent=47 // pred_region
          %v860 = vld [vmem:[#allocation2] sm:$0xff]
          %v861 = vld [vmem:[#allocation2 + $0x8] sm:$0xff]
          %v862 = vld [vmem:[#allocation2 + $0x10] sm:$0xff]
          %v863 = vld [vmem:[#allocation2 + $0x18] sm:$0xff]
          %v864 = vld [vmem:[#allocation2 + $0x20] sm:$0xff]
          %v865 = vld [vmem:[#allocation2 + $0x28] sm:$0xff]
          %v866 = vld [vmem:[#allocation2 + $0x30] sm:$0xff]
          %v867 = vld [vmem:[#allocation2 + $0x38] sm:$0xff]
          %v868 = vld [vmem:[#allocation2 + $0x40] sm:$0xff]
          %v869 = vld [vmem:[#allocation2 + $0x48] sm:$0xff]
          %v870 = vld [vmem:[#allocation2 + $0x50] sm:$0xff]
          %v871 = vld [vmem:[#allocation2 + $0x58] sm:$0xff]
          %v872 = vld [vmem:[#allocation2 + $0x60] sm:$0xff]
          %v873 = vld [vmem:[#allocation2 + $0x68] sm:$0xff]
          %v874 = vld [vmem:[#allocation2 + $0x70] sm:$0xff]
          %v875 = vld [vmem:[#allocation2 + $0x78] sm:$0xff]
          %v876 = vpack.c.bf16 %v861, %v860
          %v877 = vpack.c.bf16 %v863, %v862
          %v878 = vpack.c.bf16 %v865, %v864
          %v879 = vpack.c.bf16 %v867, %v866
          %v880 = vpack.c.bf16 %v869, %v868
          %v881 = vpack.c.bf16 %v871, %v870
          %v882 = vpack.c.bf16 %v873, %v872
          %v883 = vpack.c.bf16 %v875, %v874
          %v884 = vld [vmem:[#allocation9] sm:$0xf]
          %v885 = vld [vmem:[#allocation9 + $0x4] sm:$0xf]
          %v886 = vld [vmem:[#allocation9 + $0x8] sm:$0xf]
          %v887 = vld [vmem:[#allocation9 + $0xc] sm:$0xf]
          %v888 = vld [vmem:[#allocation9 + $0x10] sm:$0xf]
          %v889 = vld [vmem:[#allocation9 + $0x14] sm:$0xf]
          %v890 = vld [vmem:[#allocation9 + $0x18] sm:$0xf]
          %v891 = vld [vmem:[#allocation9 + $0x1c] sm:$0xf]
          %v892 = vld [vmem:[#allocation9 + $0x20] sm:$0xf]
          %v893 = vld [vmem:[#allocation9 + $0x24] sm:$0xf]
          %v894 = vld [vmem:[#allocation9 + $0x28] sm:$0xf]
          %v895 = vld [vmem:[#allocation9 + $0x2c] sm:$0xf]
          %v896 = vld [vmem:[#allocation9 + $0x30] sm:$0xf]
          %v897 = vld [vmem:[#allocation9 + $0x34] sm:$0xf]
          %v898 = vld [vmem:[#allocation9 + $0x38] sm:$0xf]
          %v899 = vld [vmem:[#allocation9 + $0x3c] sm:$0xf]
          %v900 = vld [vmem:[#allocation3] sm:$0xff]
          %v901 = vld [vmem:[#allocation3 + $0x8] sm:$0xff]
          %v902 = vld [vmem:[#allocation3 + $0x10] sm:$0xff]
          %v903 = vld [vmem:[#allocation3 + $0x18] sm:$0xff]
          %v904 = vld [vmem:[#allocation3 + $0x20] sm:$0xff]
          %v905 = vld [vmem:[#allocation3 + $0x28] sm:$0xff]
          %v906 = vld [vmem:[#allocation3 + $0x30] sm:$0xff]
          %v907 = vld [vmem:[#allocation3 + $0x38] sm:$0xff]
          %v908 = vld [vmem:[#allocation3 + $0x40] sm:$0xff]
          %v909 = vld [vmem:[#allocation3 + $0x48] sm:$0xff]
          %v910 = vld [vmem:[#allocation3 + $0x50] sm:$0xff]
          %v911 = vld [vmem:[#allocation3 + $0x58] sm:$0xff]
          %v912 = vld [vmem:[#allocation3 + $0x60] sm:$0xff]
          %v913 = vld [vmem:[#allocation3 + $0x68] sm:$0xff]
          %v914 = vld [vmem:[#allocation3 + $0x70] sm:$0xff]
          %v915 = vld [vmem:[#allocation3 + $0x78] sm:$0xff]
          %v916 = vld [vmem:[#allocation10] sm:$0x1]
          %918 = vset.pattern.permute.xlu0 0
          %919 = vperm.xlu0 %918, %v900
          %v920 = vpop.permute.xlu0 %919
          %923 = vset.pattern.permute.xlu0 0
          %924 = vperm.xlu0 %923, %v901
          %v925 = vpop.permute.xlu0 %924
          %928 = vset.pattern.permute.xlu0 0
          %929 = vperm.xlu0 %928, %v902
          %v930 = vpop.permute.xlu0 %929
          %933 = vset.pattern.permute.xlu0 0
          %934 = vperm.xlu0 %933, %v903
          %v935 = vpop.permute.xlu0 %934
          %938 = vset.pattern.permute.xlu0 0
          %939 = vperm.xlu0 %938, %v904
          %v940 = vpop.permute.xlu0 %939
          %943 = vset.pattern.permute.xlu0 0
          %944 = vperm.xlu0 %943, %v905
          %v945 = vpop.permute.xlu0 %944
          %948 = vset.pattern.permute.xlu0 0
          %949 = vperm.xlu0 %948, %v906
          %v950 = vpop.permute.xlu0 %949
          %953 = vset.pattern.permute.xlu0 0
          %954 = vperm.xlu0 %953, %v907
          %v955 = vpop.permute.xlu0 %954
          %958 = vset.pattern.permute.xlu0 0
          %959 = vperm.xlu0 %958, %v908
          %v960 = vpop.permute.xlu0 %959
          %963 = vset.pattern.permute.xlu0 0
          %964 = vperm.xlu0 %963, %v909
          %v965 = vpop.permute.xlu0 %964
          %968 = vset.pattern.permute.xlu0 0
          %969 = vperm.xlu0 %968, %v910
          %v970 = vpop.permute.xlu0 %969
          %973 = vset.pattern.permute.xlu0 0
          %974 = vperm.xlu0 %973, %v911
          %v975 = vpop.permute.xlu0 %974
          %978 = vset.pattern.permute.xlu0 0
          %979 = vperm.xlu0 %978, %v912
          %v980 = vpop.permute.xlu0 %979
          %983 = vset.pattern.permute.xlu0 0
          %984 = vperm.xlu0 %983, %v913
          %v985 = vpop.permute.xlu0 %984
          %988 = vset.pattern.permute.xlu0 0
          %989 = vperm.xlu0 %988, %v914
          %v990 = vpop.permute.xlu0 %989
          %993 = vset.pattern.permute.xlu0 0
          %994 = vperm.xlu0 %993, %v915
          %v995 = vpop.permute.xlu0 %994
          %v998 = vlaneseq
          %v999 = vshrl.u32 %v998, 7
          %v1000 = vsub.s32 0, %v999
          %v1001 = vrot.slane %v916, %v1000
          %v1003 = vmul.f32 %v920, %v1001
          %v1004 = vmul.f32 %v925, %v1001
          %v1005 = vmul.f32 %v930, %v1001
          %v1006 = vmul.f32 %v935, %v1001
          %v1007 = vmul.f32 %v940, %v1001
          %v1008 = vmul.f32 %v945, %v1001
          %v1009 = vmul.f32 %v950, %v1001
          %v1010 = vmul.f32 %v955, %v1001
          %v1011 = vmul.f32 %v960, %v1001
          %v1012 = vmul.f32 %v965, %v1001
          %v1013 = vmul.f32 %v970, %v1001
          %v1014 = vmul.f32 %v975, %v1001
          %v1015 = vmul.f32 %v980, %v1001
          %v1016 = vmul.f32 %v985, %v1001
          %v1017 = vmul.f32 %v990, %v1001
          %v1018 = vmul.f32 %v995, %v1001
          %v1035 = vunpack.c.l.b16 %v884
          %v1036 = vunpack.c.l.b16 %v885
          %v1037 = vunpack.c.l.b16 %v886
          %v1038 = vunpack.c.l.b16 %v887
          %v1039 = vunpack.c.l.b16 %v888
          %v1040 = vunpack.c.l.b16 %v889
          %v1041 = vunpack.c.l.b16 %v890
          %v1042 = vunpack.c.l.b16 %v891
          %v1043 = vunpack.c.l.b16 %v892
          %v1044 = vunpack.c.l.b16 %v893
          %v1045 = vunpack.c.l.b16 %v894
          %v1046 = vunpack.c.l.b16 %v895
          %v1047 = vunpack.c.l.b16 %v896
          %v1048 = vunpack.c.l.b16 %v897
          %v1049 = vunpack.c.l.b16 %v898
          %v1050 = vunpack.c.l.b16 %v899
          %v1051 = vpack.c.b16 %v1036, %v1035
          %v1052 = vpack.c.b16 %v1038, %v1037
          %v1053 = vpack.c.b16 %v1040, %v1039
          %v1054 = vpack.c.b16 %v1042, %v1041
          %v1055 = vpack.c.b16 %v1044, %v1043
          %v1056 = vpack.c.b16 %v1046, %v1045
          %v1057 = vpack.c.b16 %v1048, %v1047
          %v1058 = vpack.c.b16 %v1050, %v1049
          %1067 = vmatprep.subr.bf16.mxu0 0
          %1068 = vmatpush1.bf16.msra.mxu0 %v1051
          %1069 = vmatprep.subr.bf16.mxu0 0
          %1070 = vmatpush1.bf16.msra.mxu0 %v1052
          %1071 = vmatprep.subr.bf16.mxu0 0
          %1072 = vmatpush1.bf16.msra.mxu0 %v1053
          %1073 = vmatprep.subr.bf16.mxu0 0
          %1074 = vmatpush1.bf16.msra.mxu0 %v1054
          %1075 = vmatprep.subr.bf16.mxu0 0
          %1076 = vmatpush1.bf16.msra.mxu0 %v1055
          %1077 = vmatprep.subr.bf16.mxu0 0
          %1078 = vmatpush1.bf16.msra.mxu0 %v1056
          %1079 = vmatprep.subr.bf16.mxu0 0
          %1080 = vmatpush1.bf16.msra.mxu0 %v1057
          %1081 = vmatprep.subr.bf16.mxu0 0
          %1082 = vmatpush1.bf16.msra.mxu0 %v1058
          %1083 = vmatprep.subr.bf16.mxu0 0
          %1084 = vmatpush1.bf16.msra.mxu0 0
          %1085 = vmatprep.subr.bf16.mxu0 0
          %1086 = vmatpush1.bf16.msra.mxu0 0
          %1087 = vmatprep.subr.bf16.mxu0 0
          %1088 = vmatpush1.bf16.msra.mxu0 0
          %1089 = vmatprep.subr.bf16.mxu0 0
          %1090 = vmatpush1.bf16.msra.mxu0 0
          %1091 = vmatprep.subr.bf16.mxu0 0
          %1092 = vmatpush1.bf16.msra.mxu0 0
          %1093 = vmatprep.subr.bf16.mxu0 0
          %1094 = vmatpush1.bf16.msra.mxu0 0
          %1095 = vmatprep.subr.bf16.mxu0 0
          %1096 = vmatpush1.bf16.msra.mxu0 0
          %1097 = vmatprep.subr.bf16.mxu0 0
          %1098 = vmatpush1.bf16.msra.mxu0 0
          %1099 = vmatprep.mubr.bf16.mxu0 0
          %1100 = vmatmul.mubr.bf16.gmra.mrb[0].mxu0 %v876
          %v1101 = vpop.f32.mrb[0].mxu0
          %v1102 = vadd.f32 %v1003, %v1101
          %v1103 = vpop.f32.mrb[0].mxu0
          %v1104 = vpop.f32.mrb[0].mxu0
          %v1105 = vadd.f32 %v1004, %v1104
          %v1106 = vpop.f32.mrb[0].mxu0
          %1107 = vmatprep.mubr.bf16.mxu0 0
          %1108 = vmatmul.mubr.bf16.gmra.mrb[0].mxu0 %v877
          %v1109 = vpop.f32.mrb[0].mxu0
          %v1110 = vadd.f32 %v1005, %v1109
          %v1111 = vpop.f32.mrb[0].mxu0
          %v1112 = vpop.f32.mrb[0].mxu0
          %v1113 = vadd.f32 %v1006, %v1112
          %v1114 = vpop.f32.mrb[0].mxu0
          %1115 = vmatprep.mubr.bf16.mxu0 0
          %1116 = vmatmul.mubr.bf16.gmra.mrb[0].mxu0 %v878
          %v1117 = vpop.f32.mrb[0].mxu0
          %v1118 = vadd.f32 %v1007, %v1117
          %v1119 = vpop.f32.mrb[0].mxu0
          %v1120 = vpop.f32.mrb[0].mxu0
          %v1121 = vadd.f32 %v1008, %v1120
          %v1122 = vpop.f32.mrb[0].mxu0
          %1123 = vmatprep.mubr.bf16.mxu0 0
          %1124 = vmatmul.mubr.bf16.gmra.mrb[0].mxu0 %v879
          %v1125 = vpop.f32.mrb[0].mxu0
          %v1126 = vadd.f32 %v1009, %v1125
          %v1127 = vpop.f32.mrb[0].mxu0
          %v1128 = vpop.f32.mrb[0].mxu0
          %v1129 = vadd.f32 %v1010, %v1128
          %v1130 = vpop.f32.mrb[0].mxu0
          %1131 = vmatprep.mubr.bf16.mxu0 0
          %1132 = vmatmul.mubr.bf16.gmra.mrb[0].mxu0 %v880
          %v1133 = vpop.f32.mrb[0].mxu0
          %v1134 = vadd.f32 %v1011, %v1133
          %v1135 = vpop.f32.mrb[0].mxu0
          %v1136 = vpop.f32.mrb[0].mxu0
          %v1137 = vadd.f32 %v1012, %v1136
          %v1138 = vpop.f32.mrb[0].mxu0
          %1139 = vmatprep.mubr.bf16.mxu0 0
          %1140 = vmatmul.mubr.bf16.gmra.mrb[0].mxu0 %v881
          %v1141 = vpop.f32.mrb[0].mxu0
          %v1142 = vadd.f32 %v1013, %v1141
          %v1143 = vpop.f32.mrb[0].mxu0
          %v1144 = vpop.f32.mrb[0].mxu0
          %v1145 = vadd.f32 %v1014, %v1144
          %v1146 = vpop.f32.mrb[0].mxu0
          %1147 = vmatprep.mubr.bf16.mxu0 0
          %1148 = vmatmul.mubr.bf16.gmra.mrb[0].mxu0 %v882
          %v1149 = vpop.f32.mrb[0].mxu0
          %v1150 = vadd.f32 %v1015, %v1149
          %v1151 = vpop.f32.mrb[0].mxu0
          %v1152 = vpop.f32.mrb[0].mxu0
          %v1153 = vadd.f32 %v1016, %v1152
          %v1154 = vpop.f32.mrb[0].mxu0
          %1155 = vmatprep.mubr.bf16.mxu0 0
          %1156 = vmatmul.mubr.bf16.gmra.mrb[0].mxu0 %v883
          %v1157 = vpop.f32.mrb[0].mxu0
          %v1158 = vadd.f32 %v1017, %v1157
          %v1159 = vpop.f32.mrb[0].mxu0
          %v1160 = vpop.f32.mrb[0].mxu0
          %v1161 = vadd.f32 %v1018, %v1160
          %v1162 = vpop.f32.mrb[0].mxu0
          %1163 = vdwg.mxu0
          %v1164 = vmax.f32 %v1102, 0.0
          %v1165 = vmax.f32 %v1105, 0.0
          %v1166 = vmax.f32 %v1110, 0.0
          %v1167 = vmax.f32 %v1113, 0.0
          %v1168 = vmax.f32 %v1118, 0.0
          %v1169 = vmax.f32 %v1121, 0.0
          %v1170 = vmax.f32 %v1126, 0.0
          %v1171 = vmax.f32 %v1129, 0.0
          %v1172 = vmax.f32 %v1134, 0.0
          %v1173 = vmax.f32 %v1137, 0.0
          %v1174 = vmax.f32 %v1142, 0.0
          %v1175 = vmax.f32 %v1145, 0.0
          %v1176 = vmax.f32 %v1150, 0.0
          %v1177 = vmax.f32 %v1153, 0.0
          %v1178 = vmax.f32 %v1158, 0.0
          %v1179 = vmax.f32 %v1161, 0.0
          %v1180 = vld [vmem:[%s403] sm:$0xff]
          %v1181 = vld [vmem:[%s403 + $0x8] sm:$0xff]
          %v1182 = vld [vmem:[%s403 + $0x10] sm:$0xff]
          %v1183 = vld [vmem:[%s403 + $0x18] sm:$0xff]
          %v1184 = vld [vmem:[%s403 + $0x20] sm:$0xff]
          %v1185 = vld [vmem:[%s403 + $0x28] sm:$0xff]
          %v1186 = vld [vmem:[%s403 + $0x30] sm:$0xff]
          %v1187 = vld [vmem:[%s403 + $0x38] sm:$0xff]
          %v1188 = vld [vmem:[%s403 + $0x40] sm:$0xff]
          %v1189 = vld [vmem:[%s403 + $0x48] sm:$0xff]
          %v1190 = vld [vmem:[%s403 + $0x50] sm:$0xff]
          %v1191 = vld [vmem:[%s403 + $0x58] sm:$0xff]
          %v1192 = vld [vmem:[%s403 + $0x60] sm:$0xff]
          %v1193 = vld [vmem:[%s403 + $0x68] sm:$0xff]
          %v1194 = vld [vmem:[%s403 + $0x70] sm:$0xff]
          %v1195 = vld [vmem:[%s403 + $0x78] sm:$0xff]
          %vm1196 = vcmp.ge.u32.totalorder %v1180, 2147483648
          %vm1197 = vcmp.ge.u32.totalorder %v1181, 2147483648
          %vm1198 = vcmp.ge.u32.totalorder %v1182, 2147483648
          %vm1199 = vcmp.ge.u32.totalorder %v1183, 2147483648
          %vm1200 = vcmp.ge.u32.totalorder %v1184, 2147483648
          %vm1201 = vcmp.ge.u32.totalorder %v1185, 2147483648
          %vm1202 = vcmp.ge.u32.totalorder %v1186, 2147483648
          %vm1203 = vcmp.ge.u32.totalorder %v1187, 2147483648
          %vm1204 = vcmp.ge.u32.totalorder %v1188, 2147483648
          %vm1205 = vcmp.ge.u32.totalorder %v1189, 2147483648
          %vm1206 = vcmp.ge.u32.totalorder %v1190, 2147483648
          %vm1207 = vcmp.ge.u32.totalorder %v1191, 2147483648
          %vm1208 = vcmp.ge.u32.totalorder %v1192, 2147483648
          %vm1209 = vcmp.ge.u32.totalorder %v1193, 2147483648
          %vm1210 = vcmp.ge.u32.totalorder %v1194, 2147483648
          %vm1211 = vcmp.ge.u32.totalorder %v1195, 2147483648
          %v1212 = vmul.f32 %v1164, 2.0
          %v1213 = vmul.f32 %v1165, 2.0
          %v1214 = vmul.f32 %v1166, 2.0
          %v1215 = vmul.f32 %v1167, 2.0
          %v1216 = vmul.f32 %v1168, 2.0
          %v1217 = vmul.f32 %v1169, 2.0
          %v1218 = vmul.f32 %v1170, 2.0
          %v1219 = vmul.f32 %v1171, 2.0
          %v1220 = vmul.f32 %v1172, 2.0
          %v1221 = vmul.f32 %v1173, 2.0
          %v1222 = vmul.f32 %v1174, 2.0
          %v1223 = vmul.f32 %v1175, 2.0
          %v1224 = vmul.f32 %v1176, 2.0
          %v1225 = vmul.f32 %v1177, 2.0
          %v1226 = vmul.f32 %v1178, 2.0
          %v1227 = vmul.f32 %v1179, 2.0
          %v1228 = vsel %vm1196, %v1212, 0.0
          %v1229 = vsel %vm1197, %v1213, 0.0
          %v1230 = vsel %vm1198, %v1214, 0.0
          %v1231 = vsel %vm1199, %v1215, 0.0
          %v1232 = vsel %vm1200, %v1216, 0.0
          %v1233 = vsel %vm1201, %v1217, 0.0
          %v1234 = vsel %vm1202, %v1218, 0.0
          %v1235 = vsel %vm1203, %v1219, 0.0
          %v1236 = vsel %vm1204, %v1220, 0.0
          %v1237 = vsel %vm1205, %v1221, 0.0
          %v1238 = vsel %vm1206, %v1222, 0.0
          %v1239 = vsel %vm1207, %v1223, 0.0
          %v1240 = vsel %vm1208, %v1224, 0.0
          %v1241 = vsel %vm1209, %v1225, 0.0
          %v1242 = vsel %vm1210, %v1226, 0.0
          %v1243 = vsel %vm1211, %v1227, 0.0
          %v1244 = vpack.c.bf16 %v1229, %v1228
          %v1245 = vpack.c.bf16 %v1231, %v1230
          %v1246 = vpack.c.bf16 %v1233, %v1232
          %v1247 = vpack.c.bf16 %v1235, %v1234
          %v1248 = vpack.c.bf16 %v1237, %v1236
          %v1249 = vpack.c.bf16 %v1239, %v1238
          %v1250 = vpack.c.bf16 %v1241, %v1240
          %v1251 = vpack.c.bf16 %v1243, %v1242
          %v1252 = vld [vmem:[#allocation12] sm:$0xf]
          %v1253 = vld [vmem:[#allocation12 + $0x4] sm:$0xf]
          %v1254 = vld [vmem:[#allocation12 + $0x8] sm:$0xf]
          %v1255 = vld [vmem:[#allocation12 + $0xc] sm:$0xf]
          %v1256 = vld [vmem:[#allocation12 + $0x10] sm:$0xf]
          %v1257 = vld [vmem:[#allocation12 + $0x14] sm:$0xf]
          %v1258 = vld [vmem:[#allocation12 + $0x18] sm:$0xf]
          %v1259 = vld [vmem:[#allocation12 + $0x1c] sm:$0xf]
          %v1260 = vld [vmem:[#allocation12 + $0x20] sm:$0xf]
          %v1261 = vld [vmem:[#allocation12 + $0x24] sm:$0xf]
          %v1262 = vld [vmem:[#allocation12 + $0x28] sm:$0xf]
          %v1263 = vld [vmem:[#allocation12 + $0x2c] sm:$0xf]
          %v1264 = vld [vmem:[#allocation12 + $0x30] sm:$0xf]
          %v1265 = vld [vmem:[#allocation12 + $0x34] sm:$0xf]
          %v1266 = vld [vmem:[#allocation12 + $0x38] sm:$0xf]
          %v1267 = vld [vmem:[#allocation12 + $0x3c] sm:$0xf]
          %v1268 = vld [vmem:[#allocation13] sm:$0x1]
          %v1270 = vlaneseq
          %v1271 = vshrl.u32 %v1270, 7
          %v1272 = vsub.s32 0, %v1271
          %v1273 = vrot.slane %v1268, %v1272
          %v1291 = vunpack.c.l.b16 %v1252
          %v1292 = vunpack.c.l.b16 %v1253
          %v1293 = vunpack.c.l.b16 %v1254
          %v1294 = vunpack.c.l.b16 %v1255
          %v1295 = vunpack.c.l.b16 %v1256
          %v1296 = vunpack.c.l.b16 %v1257
          %v1297 = vunpack.c.l.b16 %v1258
          %v1298 = vunpack.c.l.b16 %v1259
          %v1299 = vunpack.c.l.b16 %v1260
          %v1300 = vunpack.c.l.b16 %v1261
          %v1301 = vunpack.c.l.b16 %v1262
          %v1302 = vunpack.c.l.b16 %v1263
          %v1303 = vunpack.c.l.b16 %v1264
          %v1304 = vunpack.c.l.b16 %v1265
          %v1305 = vunpack.c.l.b16 %v1266
          %v1306 = vunpack.c.l.b16 %v1267
          %v1307 = vpack.c.b16 %v1292, %v1291
          %v1308 = vpack.c.b16 %v1294, %v1293
          %v1309 = vpack.c.b16 %v1296, %v1295
          %v1310 = vpack.c.b16 %v1298, %v1297
          %v1311 = vpack.c.b16 %v1300, %v1299
          %v1312 = vpack.c.b16 %v1302, %v1301
          %v1313 = vpack.c.b16 %v1304, %v1303
          %v1314 = vpack.c.b16 %v1306, %v1305
          %1323 = vmatprep.subr.bf16.mxu0 0
          %1324 = vmatpush1.bf16.msra.mxu0 %v1307
          %1325 = vmatprep.subr.bf16.mxu0 0
          %1326 = vmatpush1.bf16.msra.mxu0 %v1308
          %1327 = vmatprep.subr.bf16.mxu0 0
          %1328 = vmatpush1.bf16.msra.mxu0 %v1309
          %1329 = vmatprep.subr.bf16.mxu0 0
          %1330 = vmatpush1.bf16.msra.mxu0 %v1310
          %1331 = vmatprep.subr.bf16.mxu0 0
          %1332 = vmatpush1.bf16.msra.mxu0 %v1311
          %1333 = vmatprep.subr.bf16.mxu0 0
          %1334 = vmatpush1.bf16.msra.mxu0 %v1312
          %1335 = vmatprep.subr.bf16.mxu0 0
          %1336 = vmatpush1.bf16.msra.mxu0 %v1313
          %1337 = vmatprep.subr.bf16.mxu0 0
          %1338 = vmatpush1.bf16.msra.mxu0 %v1314
          %1339 = vmatprep.subr.bf16.mxu0 0
          %1340 = vmatpush1.bf16.msra.mxu0 0
          %1341 = vmatprep.subr.bf16.mxu0 0
          %1342 = vmatpush1.bf16.msra.mxu0 0
          %1343 = vmatprep.subr.bf16.mxu0 0
          %1344 = vmatpush1.bf16.msra.mxu0 0
          %1345 = vmatprep.subr.bf16.mxu0 0
          %1346 = vmatpush1.bf16.msra.mxu0 0
          %1347 = vmatprep.subr.bf16.mxu0 0
          %1348 = vmatpush1.bf16.msra.mxu0 0
          %1349 = vmatprep.subr.bf16.mxu0 0
          %1350 = vmatpush1.bf16.msra.mxu0 0
          %1351 = vmatprep.subr.bf16.mxu0 0
          %1352 = vmatpush1.bf16.msra.mxu0 0
          %1353 = vmatprep.subr.bf16.mxu0 0
          %1354 = vmatpush1.bf16.msra.mxu0 0
          %1355 = vmatprep.mubr.bf16.mxu0 0
          %1356 = vmatmul.mubr.bf16.gmra.mrb[0].mxu0 %v1244
          %v1357 = vpop.f32.mrb[0].mxu0
          %v1358 = vadd.f32 %v1273, %v1357
          %v1359 = vpop.f32.mrb[0].mxu0
          %v1360 = vpop.f32.mrb[0].mxu0
          %v1361 = vadd.f32 %v1273, %v1360
          %v1362 = vpop.f32.mrb[0].mxu0
          %1363 = vmatprep.mubr.bf16.mxu0 0
          %1364 = vmatmul.mubr.bf16.gmra.mrb[0].mxu0 %v1245
          %v1365 = vpop.f32.mrb[0].mxu0
          %v1366 = vadd.f32 %v1273, %v1365
          %v1367 = vpop.f32.mrb[0].mxu0
          %v1368 = vpop.f32.mrb[0].mxu0
          %v1369 = vadd.f32 %v1273, %v1368
          %v1370 = vpop.f32.mrb[0].mxu0
          %1371 = vmatprep.mubr.bf16.mxu0 0
          %1372 = vmatmul.mubr.bf16.gmra.mrb[0].mxu0 %v1246
          %v1373 = vpop.f32.mrb[0].mxu0
          %v1374 = vadd.f32 %v1273, %v1373
          %v1375 = vpop.f32.mrb[0].mxu0
          %v1376 = vpop.f32.mrb[0].mxu0
          %v1377 = vadd.f32 %v1273, %v1376
          %v1378 = vpop.f32.mrb[0].mxu0
          %1379 = vmatprep.mubr.bf16.mxu0 0
          %1380 = vmatmul.mubr.bf16.gmra.mrb[0].mxu0 %v1247
          %v1381 = vpop.f32.mrb[0].mxu0
          %v1382 = vadd.f32 %v1273, %v1381
          %v1383 = vpop.f32.mrb[0].mxu0
          %v1384 = vpop.f32.mrb[0].mxu0
          %v1385 = vadd.f32 %v1273, %v1384
          %v1386 = vpop.f32.mrb[0].mxu0
          %1387 = vmatprep.mubr.bf16.mxu0 0
          %1388 = vmatmul.mubr.bf16.gmra.mrb[0].mxu0 %v1248
          %v1389 = vpop.f32.mrb[0].mxu0
          %v1390 = vadd.f32 %v1273, %v1389
          %v1391 = vpop.f32.mrb[0].mxu0
          %v1392 = vpop.f32.mrb[0].mxu0
          %v1393 = vadd.f32 %v1273, %v1392
          %v1394 = vpop.f32.mrb[0].mxu0
          %1395 = vmatprep.mubr.bf16.mxu0 0
          %1396 = vmatmul.mubr.bf16.gmra.mrb[0].mxu0 %v1249
          %v1397 = vpop.f32.mrb[0].mxu0
          %v1398 = vadd.f32 %v1273, %v1397
          %v1399 = vpop.f32.mrb[0].mxu0
          %v1400 = vpop.f32.mrb[0].mxu0
          %v1401 = vadd.f32 %v1273, %v1400
          %v1402 = vpop.f32.mrb[0].mxu0
          %1403 = vmatprep.mubr.bf16.mxu0 0
          %1404 = vmatmul.mubr.bf16.gmra.mrb[0].mxu0 %v1250
          %v1405 = vpop.f32.mrb[0].mxu0
          %v1406 = vadd.f32 %v1273, %v1405
          %v1407 = vpop.f32.mrb[0].mxu0
          %v1408 = vpop.f32.mrb[0].mxu0
          %v1409 = vadd.f32 %v1273, %v1408
          %v1410 = vpop.f32.mrb[0].mxu0
          %1411 = vmatprep.mubr.bf16.mxu0 0
          %1412 = vmatmul.mubr.bf16.gmra.mrb[0].mxu0 %v1251
          %v1413 = vpop.f32.mrb[0].mxu0
          %v1414 = vadd.f32 %v1273, %v1413
          %v1415 = vpop.f32.mrb[0].mxu0
          %v1416 = vpop.f32.mrb[0].mxu0
          %v1417 = vadd.f32 %v1273, %v1416
          %v1418 = vpop.f32.mrb[0].mxu0
          %1419 = vdwg.mxu0
          %1420 = vst [vmem:[%s443] sm:$0xff] %v1358
          %1421 = vst [vmem:[%s443 + $0x8] sm:$0xff] %v1361
          %1422 = vst [vmem:[%s443 + $0x10] sm:$0xff] %v1366
          %1423 = vst [vmem:[%s443 + $0x18] sm:$0xff] %v1369
          %1424 = vst [vmem:[%s443 + $0x20] sm:$0xff] %v1374
          %1425 = vst [vmem:[%s443 + $0x28] sm:$0xff] %v1377
          %1426 = vst [vmem:[%s443 + $0x30] sm:$0xff] %v1382
          %1427 = vst [vmem:[%s443 + $0x38] sm:$0xff] %v1385
          %1428 = vst [vmem:[%s443 + $0x40] sm:$0xff] %v1390
          %1429 = vst [vmem:[%s443 + $0x48] sm:$0xff] %v1393
          %1430 = vst [vmem:[%s443 + $0x50] sm:$0xff] %v1398
          %1431 = vst [vmem:[%s443 + $0x58] sm:$0xff] %v1401
          %1432 = vst [vmem:[%s443 + $0x60] sm:$0xff] %v1406
          %1433 = vst [vmem:[%s443 + $0x68] sm:$0xff] %v1409
          %1434 = vst [vmem:[%s443 + $0x70] sm:$0xff] %v1414
          %1435 = vst [vmem:[%s443 + $0x78] sm:$0xff] %v1417
        $region84: #{tpu_custom_call.1} parent=47 // pred_fallthru
          _
        %s1436 = sand.u32 %s213, 1
        %s1437 = scalar_lea.sflag [#allocation6], %s1436
        %s1438 = sand.u32 %s213, 1
        %s1439 = smul.addr %s1438, 128
        %s1440 = scalar_lea.vmem [#allocation16], %s1439
        // Predicated region
        $region85: #{tpu_custom_call.1} parent=47 // pred_check
          %p1441 = pneg %p223
        $region86: #{tpu_custom_call.1} parent=47 // pred_check_branch
          %1443 = sbr.rel (%p1441) target = $region88
        $region87: #{tpu_custom_call.1} parent=47 // pred_region
          %s1444 = smul.u32 16, %s33
          %s1446 = ssub.s32 2048, 2048
          %1447 = vsyncadd %s1437, %s1446
          %s1448 = smul.addr %s1444, 128
          %s1449 = scalar_lea.hbm %s7, %s1448
          %s1450 = sshll.u32 %s1440, 4
          %s1451 = int_to_ptr.vmem [resolvable:$true] %s1450
          %1456 = dma.vmem_to_hbm [thread:$0]  %s1451, 2048, %s1449, %s1437, 128, 128, 8
        $region88: #{tpu_custom_call.1} parent=47 // pred_fallthru
          _
      $region48: #{tpu_custom_call.1} parent=5 // pred_fallthru
        _
      %p1457 = scmp.le.s32.totalorder 2, %s24
      // Predicated region
      $region89: #{tpu_custom_call.1} parent=5 // pred_check
        %p1458 = pneg %p1457
      $region90: #{tpu_custom_call.1} parent=5 // pred_check_branch
        %1460 = sbr.rel (%p1458) target = $region92
      $region91: #{tpu_custom_call.1} parent=5 // pred_region
        %s1461 = ssub.s32 %s24, 2
        // Predicated region
        $region93: #{tpu_custom_call.1} parent=91 // pred_check
          %p1462 = pneg %p229
        $region94: #{tpu_custom_call.1} parent=91 // pred_check_branch
          %1464 = sbr.rel (%p1462) target = $region96
        $region95: #{tpu_custom_call.1} parent=91 // pred_region
          %s1465 = sand.u32 %s214, 1
          %s1466 = scalar_lea.sflag [#allocation6], %s1465
          %s1467 = sand.u32 %s214, 1
          %s1468 = smul.addr %s1467, 128
          %s1469 = scalar_lea.vmem [#allocation16], %s1468
          %1470 = dma.done %s1466, 2048
        $region96: #{tpu_custom_call.1} parent=91 // pred_fallthru
          _
      $region92: #{tpu_custom_call.1} parent=5 // pred_fallthru
        _
    $region6: #{tpu_custom_call.1} parent=1 // loop_footer
      %s28 = sadd.s32 1, %s24
    $region7: #{tpu_custom_call.1} parent=1 // loop_footer_branch
      %23 = sbr.rel target = $region3
    $region8: #{tpu_custom_call.1} parent=1 // loop_exit
      _
    %1471 = vsyncpa [#allocation5], 1
    %s1472 = scalar_lea.sflag [#allocation5], 1
    %1473 = vsyncpa %s1472, 1
    %1474 = vsyncpa [#allocation8], 1
    %s1475 = scalar_lea.sflag [#allocation8], 1
    %1476 = vsyncpa %s1475, 1
    %1477 = vsyncpa [#allocation11], 1
    %1478 = vsyncpa [#allocation14], 1
    %1479 = vsyncpa [#allocation6], 1
    %s1480 = scalar_lea.sflag [#allocation6], 1
    %1481 = vsyncpa %s1480, 1

</llo_original>
